<compile_context>
chip_gen: v7x
topology: tpu7x:2x2x1
jax: 0.10.0
libtpu: 0.0.40
codegen_flags: <defaults>
</compile_context>

<pallas_src>
import functools

import jax
import jax.numpy as jnp
from jax.experimental import pallas as pl
from jax.experimental.pallas import tpu as pltpu

K_MAX = 5                   # largest branch kernel size
PAD = (K_MAX - 1) // 2      # shared halo for all branches


def _fused_conv_relu_kernel(x_ref, wt_ref, b_ref, o_ref, *,
                            th: int, w: int, cin: int, k: int, mxu_dtype):
    """One (batch, row-tile) step of the fused 3-branch conv + bias + ReLU.

    x_ref : (1, Cin, Hp, Wp)      padded input image (NCHW), whole image
    wt_ref: (3*Cout, k*k*Cin)     combined transposed weight, columns ordered (ky, kx, cin)
    b_ref : (3*Cout, 1)           combined bias
    o_ref : (1, 3*Cout, TH*W)     output rows [t*TH, (t+1)*TH) flattened over (H, W)
    """
    t = pl.program_id(1)
    r0 = pl.multiple_of(t * th, th)        # first padded-input row of this tile

    # im2col, transposed: row order (ky, kx, cin) matches wt_ref's column order.
    pieces = []
    for ky in range(k):
        for kx in range(k):
            win = x_ref[0, :, pl.ds(r0 + ky, th), kx:kx + w]   # (Cin, TH, W)
            pieces.append(win.reshape(cin, th * w))
    patch_t = jnp.concatenate(pieces, axis=0)                  # (k*k*Cin, TH*W)

    wmat = wt_ref[...]
    if mxu_dtype is not None:              # optional bf16 MXU operands (v5e/v6e/v7x)
        patch_t = patch_t.astype(mxu_dtype)
        wmat = wmat.astype(mxu_dtype)

    # Single MXU matmul: lane-dense (3*Cout, TH*W) result, f32 accumulation.
    acc = jnp.dot(wmat, patch_t, preferred_element_type=jnp.float32)
    acc = jnp.maximum(acc + b_ref[...], 0.0)                   # bias + ReLU fused
    o_ref[...] = acc[None].astype(o_ref.dtype)


def init_generic_layer_params(key, first: int, last: int):
    """Per-branch params with PyTorch nn.Conv2d layout: w (out, in, kh, kw), b (out,)."""
    params = {}
    for name, k in (("P1", 1), ("P3", 3), ("P5", 5)):
        key, wk, bk = jax.random.split(key, 3)
        fan_in = first * k * k
        bound = 1.0 / jnp.sqrt(fan_in)
        wgt = jax.random.uniform(wk, (last, first, k, k), jnp.float32, -bound, bound)
        b = jax.random.uniform(bk, (last,), jnp.float32, -bound, bound)
        params[name] = (wgt, b)
    return params


def fuse_generic_layer_params(params):
    """Zero-embed the 1x1/3x3 weights into the 5x5 tap grid and stack output
    channels in the same order as torch.cat((p1, p3, p5), dim=1).

    Returns wt (3*Cout, 25*Cin) with column order (ky, kx, cin), and b (3*Cout,).
    """
    w_blocks, b_blocks = [], []
    for name, k in (("P1", 1), ("P3", 3), ("P5", 5)):
        wgt, b = params[name]                                  # (Cout, Cin, k, k)
        cout, cin = wgt.shape[0], wgt.shape[1]
        off = (K_MAX - k) // 2
        w_full = jnp.zeros((cout, cin, K_MAX, K_MAX), wgt.dtype)
        w_full = w_full.at[:, :, off:off + k, off:off + k].set(wgt)
        w_full = jnp.transpose(w_full, (0, 2, 3, 1))           # (Cout, K, K, Cin)
        w_blocks.append(w_full.reshape(cout, K_MAX * K_MAX * cin))
        b_blocks.append(b)
    return jnp.concatenate(w_blocks, axis=0), jnp.concatenate(b_blocks, axis=0)


def generic_layer_forward(fused_params, x_nchw, *, tile_h: int = 8, mxu_dtype=None):
    """Forward pass of GenericLayer. Input and output are NCHW like PyTorch."""
    wt, bias = fused_params
    n, cin, h, w = x_nchw.shape
    cout3 = wt.shape[0]

    # Pad once to the max halo; all branches read from this single padded tile.
    x_pad = jnp.pad(x_nchw, ((0, 0), (0, 0), (PAD, PAD), (PAD, PAD)))
    hp, wp = h + 2 * PAD, w + 2 * PAD

    # Spatial row tiling: TH rows per grid step; TH*W must be lane-dense (x128).
    th = tile_h
    if h % th != 0 or (th * w) % 128 != 0:
        th = h                               # fall back to whole-image tiles
    ht = h // th
    # TODO(synk): for very large H, tile the input H dim too (pl.Element blocks
    # with a 4-row halo) instead of keeping the whole padded image per step.

    kernel = functools.partial(
        _fused_conv_relu_kernel, th=th, w=w, cin=cin, k=K_MAX, mxu_dtype=mxu_dtype)

    out_flat = pl.pallas_call(
        kernel,
        out_shape=jax.ShapeDtypeStruct((n, cout3, h * w), x_nchw.dtype),
        grid_spec=pltpu.PrefetchScalarGridSpec(
            num_scalar_prefetch=0,
            grid=(n, ht),
            in_specs=[
                # Whole padded image; block index is constant along the row-tile
                # axis, so the pipeline fetches it once per image (no re-read).
                pl.BlockSpec((1, cin, hp, wp), lambda b, t: (b, 0, 0, 0)),
                pl.BlockSpec((cout3, K_MAX * K_MAX * cin), lambda b, t: (0, 0)),
                pl.BlockSpec((cout3, 1), lambda b, t: (0, 0)),
            ],
            out_specs=pl.BlockSpec((1, cout3, th * w), lambda b, t: (b, 0, t)),
        ),
        compiler_params=pltpu.CompilerParams(
            dimension_semantics=("parallel", "parallel"),
            vmem_limit_bytes=32 * 1024 * 1024,   # explicit budget, fits v7x (64 MiB)
        ),
    )(x_pad, wt, bias.reshape(cout3, 1))

    # Kernel already emits NCHW (channels, flattened H*W): final step is a free reshape.
    return out_flat.reshape(n, cout3, h, w)


def _reference_forward(params, x):
    """Plain-JAX reference (same semantics as the PyTorch module)."""
    outs = []
    for name, k in (("P1", 1), ("P3", 3), ("P5", 5)):
        wgt, b = params[name]
        p = (k - 1) // 2
        y = jax.lax.conv_general_dilated(
            x, wgt, window_strides=(1, 1), padding=[(p, p), (p, p)],
            dimension_numbers=("NCHW", "OIHW", "NCHW"))
        outs.append(jnp.maximum(y + b[None, :, None, None], 0.0))
    return jnp.concatenate(outs, axis=1)


if __name__ == "__main__":
    first, last = 4, 4
    n, h, w = 2, 16, 16

    key = jax.random.PRNGKey(0)
    key, pkey, xkey = jax.random.split(key, 3)
    params = init_generic_layer_params(pkey, first, last)
    fused = fuse_generic_layer_params(params)
    x = jax.random.normal(xkey, (n, first, h, w), jnp.float32)

    out = jax.block_until_ready(generic_layer_forward(fused, x))
    assert out.shape == (n, 3 * last, h, w), out.shape

    ref = jax.block_until_ready(_reference_forward(params, x))
    max_err = float(jnp.max(jnp.abs(out - ref)))
    assert max_err < 1e-1, f"max abs error vs reference: {max_err}"

    print("KERNEL_OK")
</pallas_src>

<mosaic_0001>
module attributes {stable_mosaic.version = 11 : i64} {
  func.func @_fused_conv_relu_kernel(%arg0: i32, %arg1: i32, %arg2: memref<1x4x20x20xf32, #tpu.memory_space<vmem>>, %arg3: memref<12x100xf32, #tpu.memory_space<vmem>>, %arg4: memref<12x1xf32, #tpu.memory_space<vmem>>, %arg5: memref<1x12x128xf32, #tpu.memory_space<vmem>>) attributes {dimension_semantics = [#tpu.dimension_semantics<parallel>, #tpu.dimension_semantics<parallel>], iteration_bounds = array<i64: 2, 2>, scalar_prefetch = 0 : i64, scratch_operands = 0 : i64, tpu.core_type = #tpu.core_type<tc>, window_params = [{transform_indices = @transform_0, window_bounds = array<i64: 1, 4, 20, 20>}, {pipeline_mode = #tpu.pipeline_mode<synchronous>, transform_indices = @transform_1, window_bounds = array<i64: 12, 100>}, {pipeline_mode = #tpu.pipeline_mode<synchronous>, transform_indices = @transform_2, window_bounds = array<i64: 12, 1>}, {transform_indices = @transform_3, window_bounds = array<i64: 1, 12, 128>}]} {
    %c8_i32 = arith.constant 8 : i32
    %0 = arith.muli %arg1, %c8_i32 : i32
    %1 = tpu.assume_multiple %0, 8 : i32
    %c0_i32 = arith.constant 0 : i32
    %2 = arith.addi %1, %c0_i32 : i32
    %c0 = arith.constant 0 : index
    %c0_0 = arith.constant 0 : index
    %3 = arith.index_cast %2 : i32 to index
    %c0_1 = arith.constant 0 : index
    %4 = vector.load %arg2[%c0, %c0_0, %3, %c0_1] : memref<1x4x20x20xf32, #tpu.memory_space<vmem>>, vector<1x4x8x16xf32>
    %5 = vector.shape_cast %4 : vector<1x4x8x16xf32> to vector<4x8x16xf32>
    %6 = vector.shape_cast %5 : vector<4x8x16xf32> to vector<4x128xf32>
    %c0_i32_2 = arith.constant 0 : i32
    %7 = arith.addi %1, %c0_i32_2 : i32
    %c0_3 = arith.constant 0 : index
    %c0_4 = arith.constant 0 : index
    %8 = arith.index_cast %7 : i32 to index
    %c1 = arith.constant 1 : index
    %9 = vector.load %arg2[%c0_3, %c0_4, %8, %c1] : memref<1x4x20x20xf32, #tpu.memory_space<vmem>>, vector<1x4x8x16xf32>
    %10 = vector.shape_cast %9 : vector<1x4x8x16xf32> to vector<4x8x16xf32>
    %11 = vector.shape_cast %10 : vector<4x8x16xf32> to vector<4x128xf32>
    %c0_i32_5 = arith.constant 0 : i32
    %12 = arith.addi %1, %c0_i32_5 : i32
    %c0_6 = arith.constant 0 : index
    %c0_7 = arith.constant 0 : index
    %13 = arith.index_cast %12 : i32 to index
    %c2 = arith.constant 2 : index
    %14 = vector.load %arg2[%c0_6, %c0_7, %13, %c2] : memref<1x4x20x20xf32, #tpu.memory_space<vmem>>, vector<1x4x8x16xf32>
    %15 = vector.shape_cast %14 : vector<1x4x8x16xf32> to vector<4x8x16xf32>
    %16 = vector.shape_cast %15 : vector<4x8x16xf32> to vector<4x128xf32>
    %c0_i32_8 = arith.constant 0 : i32
    %17 = arith.addi %1, %c0_i32_8 : i32
    %c0_9 = arith.constant 0 : index
    %c0_10 = arith.constant 0 : index
    %18 = arith.index_cast %17 : i32 to index
    %c3 = arith.constant 3 : index
    %19 = vector.load %arg2[%c0_9, %c0_10, %18, %c3] : memref<1x4x20x20xf32, #tpu.memory_space<vmem>>, vector<1x4x8x16xf32>
    %20 = vector.shape_cast %19 : vector<1x4x8x16xf32> to vector<4x8x16xf32>
    %21 = vector.shape_cast %20 : vector<4x8x16xf32> to vector<4x128xf32>
    %c0_i32_11 = arith.constant 0 : i32
    %22 = arith.addi %1, %c0_i32_11 : i32
    %c0_12 = arith.constant 0 : index
    %c0_13 = arith.constant 0 : index
    %23 = arith.index_cast %22 : i32 to index
    %c4 = arith.constant 4 : index
    %24 = vector.load %arg2[%c0_12, %c0_13, %23, %c4] : memref<1x4x20x20xf32, #tpu.memory_space<vmem>>, vector<1x4x8x16xf32>
    %25 = vector.shape_cast %24 : vector<1x4x8x16xf32> to vector<4x8x16xf32>
    %26 = vector.shape_cast %25 : vector<4x8x16xf32> to vector<4x128xf32>
    %c1_i32 = arith.constant 1 : i32
    %27 = arith.addi %1, %c1_i32 : i32
    %c0_14 = arith.constant 0 : index
    %c0_15 = arith.constant 0 : index
    %28 = arith.index_cast %27 : i32 to index
    %c0_16 = arith.constant 0 : index
    %29 = vector.load %arg2[%c0_14, %c0_15, %28, %c0_16] : memref<1x4x20x20xf32, #tpu.memory_space<vmem>>, vector<1x4x8x16xf32>
    %30 = vector.shape_cast %29 : vector<1x4x8x16xf32> to vector<4x8x16xf32>
    %31 = vector.shape_cast %30 : vector<4x8x16xf32> to vector<4x128xf32>
    %c1_i32_17 = arith.constant 1 : i32
    %32 = arith.addi %1, %c1_i32_17 : i32
    %c0_18 = arith.constant 0 : index
    %c0_19 = arith.constant 0 : index
    %33 = arith.index_cast %32 : i32 to index
    %c1_20 = arith.constant 1 : index
    %34 = vector.load %arg2[%c0_18, %c0_19, %33, %c1_20] : memref<1x4x20x20xf32, #tpu.memory_space<vmem>>, vector<1x4x8x16xf32>
    %35 = vector.shape_cast %34 : vector<1x4x8x16xf32> to vector<4x8x16xf32>
    %36 = vector.shape_cast %35 : vector<4x8x16xf32> to vector<4x128xf32>
    %c1_i32_21 = arith.constant 1 : i32
    %37 = arith.addi %1, %c1_i32_21 : i32
    %c0_22 = arith.constant 0 : index
    %c0_23 = arith.constant 0 : index
    %38 = arith.index_cast %37 : i32 to index
    %c2_24 = arith.constant 2 : index
    %39 = vector.load %arg2[%c0_22, %c0_23, %38, %c2_24] : memref<1x4x20x20xf32, #tpu.memory_space<vmem>>, vector<1x4x8x16xf32>
    %40 = vector.shape_cast %39 : vector<1x4x8x16xf32> to vector<4x8x16xf32>
    %41 = vector.shape_cast %40 : vector<4x8x16xf32> to vector<4x128xf32>
    %c1_i32_25 = arith.constant 1 : i32
    %42 = arith.addi %1, %c1_i32_25 : i32
    %c0_26 = arith.constant 0 : index
    %c0_27 = arith.constant 0 : index
    %43 = arith.index_cast %42 : i32 to index
    %c3_28 = arith.constant 3 : index
    %44 = vector.load %arg2[%c0_26, %c0_27, %43, %c3_28] : memref<1x4x20x20xf32, #tpu.memory_space<vmem>>, vector<1x4x8x16xf32>
    %45 = vector.shape_cast %44 : vector<1x4x8x16xf32> to vector<4x8x16xf32>
    %46 = vector.shape_cast %45 : vector<4x8x16xf32> to vector<4x128xf32>
    %c1_i32_29 = arith.constant 1 : i32
    %47 = arith.addi %1, %c1_i32_29 : i32
    %c0_30 = arith.constant 0 : index
    %c0_31 = arith.constant 0 : index
    %48 = arith.index_cast %47 : i32 to index
    %c4_32 = arith.constant 4 : index
    %49 = vector.load %arg2[%c0_30, %c0_31, %48, %c4_32] : memref<1x4x20x20xf32, #tpu.memory_space<vmem>>, vector<1x4x8x16xf32>
    %50 = vector.shape_cast %49 : vector<1x4x8x16xf32> to vector<4x8x16xf32>
    %51 = vector.shape_cast %50 : vector<4x8x16xf32> to vector<4x128xf32>
    %c2_i32 = arith.constant 2 : i32
    %52 = arith.addi %1, %c2_i32 : i32
    %c0_33 = arith.constant 0 : index
    %c0_34 = arith.constant 0 : index
    %53 = arith.index_cast %52 : i32 to index
    %c0_35 = arith.constant 0 : index
    %54 = vector.load %arg2[%c0_33, %c0_34, %53, %c0_35] : memref<1x4x20x20xf32, #tpu.memory_space<vmem>>, vector<1x4x8x16xf32>
    %55 = vector.shape_cast %54 : vector<1x4x8x16xf32> to vector<4x8x16xf32>
    %56 = vector.shape_cast %55 : vector<4x8x16xf32> to vector<4x128xf32>
    %c2_i32_36 = arith.constant 2 : i32
    %57 = arith.addi %1, %c2_i32_36 : i32
    %c0_37 = arith.constant 0 : index
    %c0_38 = arith.constant 0 : index
    %58 = arith.index_cast %57 : i32 to index
    %c1_39 = arith.constant 1 : index
    %59 = vector.load %arg2[%c0_37, %c0_38, %58, %c1_39] : memref<1x4x20x20xf32, #tpu.memory_space<vmem>>, vector<1x4x8x16xf32>
    %60 = vector.shape_cast %59 : vector<1x4x8x16xf32> to vector<4x8x16xf32>
    %61 = vector.shape_cast %60 : vector<4x8x16xf32> to vector<4x128xf32>
    %c2_i32_40 = arith.constant 2 : i32
    %62 = arith.addi %1, %c2_i32_40 : i32
    %c0_41 = arith.constant 0 : index
    %c0_42 = arith.constant 0 : index
    %63 = arith.index_cast %62 : i32 to index
    %c2_43 = arith.constant 2 : index
    %64 = vector.load %arg2[%c0_41, %c0_42, %63, %c2_43] : memref<1x4x20x20xf32, #tpu.memory_space<vmem>>, vector<1x4x8x16xf32>
    %65 = vector.shape_cast %64 : vector<1x4x8x16xf32> to vector<4x8x16xf32>
    %66 = vector.shape_cast %65 : vector<4x8x16xf32> to vector<4x128xf32>
    %c2_i32_44 = arith.constant 2 : i32
    %67 = arith.addi %1, %c2_i32_44 : i32
    %c0_45 = arith.constant 0 : index
    %c0_46 = arith.constant 0 : index
    %68 = arith.index_cast %67 : i32 to index
    %c3_47 = arith.constant 3 : index
    %69 = vector.load %arg2[%c0_45, %c0_46, %68, %c3_47] : memref<1x4x20x20xf32, #tpu.memory_space<vmem>>, vector<1x4x8x16xf32>
    %70 = vector.shape_cast %69 : vector<1x4x8x16xf32> to vector<4x8x16xf32>
    %71 = vector.shape_cast %70 : vector<4x8x16xf32> to vector<4x128xf32>
    %c2_i32_48 = arith.constant 2 : i32
    %72 = arith.addi %1, %c2_i32_48 : i32
    %c0_49 = arith.constant 0 : index
    %c0_50 = arith.constant 0 : index
    %73 = arith.index_cast %72 : i32 to index
    %c4_51 = arith.constant 4 : index
    %74 = vector.load %arg2[%c0_49, %c0_50, %73, %c4_51] : memref<1x4x20x20xf32, #tpu.memory_space<vmem>>, vector<1x4x8x16xf32>
    %75 = vector.shape_cast %74 : vector<1x4x8x16xf32> to vector<4x8x16xf32>
    %76 = vector.shape_cast %75 : vector<4x8x16xf32> to vector<4x128xf32>
    %c3_i32 = arith.constant 3 : i32
    %77 = arith.addi %1, %c3_i32 : i32
    %c0_52 = arith.constant 0 : index
    %c0_53 = arith.constant 0 : index
    %78 = arith.index_cast %77 : i32 to index
    %c0_54 = arith.constant 0 : index
    %79 = vector.load %arg2[%c0_52, %c0_53, %78, %c0_54] : memref<1x4x20x20xf32, #tpu.memory_space<vmem>>, vector<1x4x8x16xf32>
    %80 = vector.shape_cast %79 : vector<1x4x8x16xf32> to vector<4x8x16xf32>
    %81 = vector.shape_cast %80 : vector<4x8x16xf32> to vector<4x128xf32>
    %c3_i32_55 = arith.constant 3 : i32
    %82 = arith.addi %1, %c3_i32_55 : i32
    %c0_56 = arith.constant 0 : index
    %c0_57 = arith.constant 0 : index
    %83 = arith.index_cast %82 : i32 to index
    %c1_58 = arith.constant 1 : index
    %84 = vector.load %arg2[%c0_56, %c0_57, %83, %c1_58] : memref<1x4x20x20xf32, #tpu.memory_space<vmem>>, vector<1x4x8x16xf32>
    %85 = vector.shape_cast %84 : vector<1x4x8x16xf32> to vector<4x8x16xf32>
    %86 = vector.shape_cast %85 : vector<4x8x16xf32> to vector<4x128xf32>
    %c3_i32_59 = arith.constant 3 : i32
    %87 = arith.addi %1, %c3_i32_59 : i32
    %c0_60 = arith.constant 0 : index
    %c0_61 = arith.constant 0 : index
    %88 = arith.index_cast %87 : i32 to index
    %c2_62 = arith.constant 2 : index
    %89 = vector.load %arg2[%c0_60, %c0_61, %88, %c2_62] : memref<1x4x20x20xf32, #tpu.memory_space<vmem>>, vector<1x4x8x16xf32>
    %90 = vector.shape_cast %89 : vector<1x4x8x16xf32> to vector<4x8x16xf32>
    %91 = vector.shape_cast %90 : vector<4x8x16xf32> to vector<4x128xf32>
    %c3_i32_63 = arith.constant 3 : i32
    %92 = arith.addi %1, %c3_i32_63 : i32
    %c0_64 = arith.constant 0 : index
    %c0_65 = arith.constant 0 : index
    %93 = arith.index_cast %92 : i32 to index
    %c3_66 = arith.constant 3 : index
    %94 = vector.load %arg2[%c0_64, %c0_65, %93, %c3_66] : memref<1x4x20x20xf32, #tpu.memory_space<vmem>>, vector<1x4x8x16xf32>
    %95 = vector.shape_cast %94 : vector<1x4x8x16xf32> to vector<4x8x16xf32>
    %96 = vector.shape_cast %95 : vector<4x8x16xf32> to vector<4x128xf32>
    %c3_i32_67 = arith.constant 3 : i32
    %97 = arith.addi %1, %c3_i32_67 : i32
    %c0_68 = arith.constant 0 : index
    %c0_69 = arith.constant 0 : index
    %98 = arith.index_cast %97 : i32 to index
    %c4_70 = arith.constant 4 : index
    %99 = vector.load %arg2[%c0_68, %c0_69, %98, %c4_70] : memref<1x4x20x20xf32, #tpu.memory_space<vmem>>, vector<1x4x8x16xf32>
    %100 = vector.shape_cast %99 : vector<1x4x8x16xf32> to vector<4x8x16xf32>
    %101 = vector.shape_cast %100 : vector<4x8x16xf32> to vector<4x128xf32>
    %c4_i32 = arith.constant 4 : i32
    %102 = arith.addi %1, %c4_i32 : i32
    %c0_71 = arith.constant 0 : index
    %c0_72 = arith.constant 0 : index
    %103 = arith.index_cast %102 : i32 to index
    %c0_73 = arith.constant 0 : index
    %104 = vector.load %arg2[%c0_71, %c0_72, %103, %c0_73] : memref<1x4x20x20xf32, #tpu.memory_space<vmem>>, vector<1x4x8x16xf32>
    %105 = vector.shape_cast %104 : vector<1x4x8x16xf32> to vector<4x8x16xf32>
    %106 = vector.shape_cast %105 : vector<4x8x16xf32> to vector<4x128xf32>
    %c4_i32_74 = arith.constant 4 : i32
    %107 = arith.addi %1, %c4_i32_74 : i32
    %c0_75 = arith.constant 0 : index
    %c0_76 = arith.constant 0 : index
    %108 = arith.index_cast %107 : i32 to index
    %c1_77 = arith.constant 1 : index
    %109 = vector.load %arg2[%c0_75, %c0_76, %108, %c1_77] : memref<1x4x20x20xf32, #tpu.memory_space<vmem>>, vector<1x4x8x16xf32>
    %110 = vector.shape_cast %109 : vector<1x4x8x16xf32> to vector<4x8x16xf32>
    %111 = vector.shape_cast %110 : vector<4x8x16xf32> to vector<4x128xf32>
    %c4_i32_78 = arith.constant 4 : i32
    %112 = arith.addi %1, %c4_i32_78 : i32
    %c0_79 = arith.constant 0 : index
    %c0_80 = arith.constant 0 : index
    %113 = arith.index_cast %112 : i32 to index
    %c2_81 = arith.constant 2 : index
    %114 = vector.load %arg2[%c0_79, %c0_80, %113, %c2_81] : memref<1x4x20x20xf32, #tpu.memory_space<vmem>>, vector<1x4x8x16xf32>
    %115 = vector.shape_cast %114 : vector<1x4x8x16xf32> to vector<4x8x16xf32>
    %116 = vector.shape_cast %115 : vector<4x8x16xf32> to vector<4x128xf32>
    %c4_i32_82 = arith.constant 4 : i32
    %117 = arith.addi %1, %c4_i32_82 : i32
    %c0_83 = arith.constant 0 : index
    %c0_84 = arith.constant 0 : index
    %118 = arith.index_cast %117 : i32 to index
    %c3_85 = arith.constant 3 : index
    %119 = vector.load %arg2[%c0_83, %c0_84, %118, %c3_85] : memref<1x4x20x20xf32, #tpu.memory_space<vmem>>, vector<1x4x8x16xf32>
    %120 = vector.shape_cast %119 : vector<1x4x8x16xf32> to vector<4x8x16xf32>
    %121 = vector.shape_cast %120 : vector<4x8x16xf32> to vector<4x128xf32>
    %c4_i32_86 = arith.constant 4 : i32
    %122 = arith.addi %1, %c4_i32_86 : i32
    %c0_87 = arith.constant 0 : index
    %c0_88 = arith.constant 0 : index
    %123 = arith.index_cast %122 : i32 to index
    %c4_89 = arith.constant 4 : index
    %124 = vector.load %arg2[%c0_87, %c0_88, %123, %c4_89] : memref<1x4x20x20xf32, #tpu.memory_space<vmem>>, vector<1x4x8x16xf32>
    %125 = vector.shape_cast %124 : vector<1x4x8x16xf32> to vector<4x8x16xf32>
    %126 = vector.shape_cast %125 : vector<4x8x16xf32> to vector<4x128xf32>
    %127 = tpu.concatenate %6, %11, %16, %21, %26, %31, %36, %41, %46, %51, %56, %61, %66, %71, %76, %81 in 0 : vector<4x128xf32>, vector<4x128xf32>, vector<4x128xf32>, vector<4x128xf32>, vector<4x128xf32>, vector<4x128xf32>, vector<4x128xf32>, vector<4x128xf32>, vector<4x128xf32>, vector<4x128xf32>, vector<4x128xf32>, vector<4x128xf32>, vector<4x128xf32>, vector<4x128xf32>, vector<4x128xf32>, vector<4x128xf32> -> vector<64x128xf32>
    %128 = tpu.concatenate %86, %91, %96, %101, %106, %111, %116, %121, %126 in 0 : vector<4x128xf32>, vector<4x128xf32>, vector<4x128xf32>, vector<4x128xf32>, vector<4x128xf32>, vector<4x128xf32>, vector<4x128xf32>, vector<4x128xf32>, vector<4x128xf32> -> vector<36x128xf32>
    %129 = tpu.concatenate %127, %128 in 0 : vector<64x128xf32>, vector<36x128xf32> -> vector<100x128xf32>
    %c0_90 = arith.constant 0 : index
    %c0_91 = arith.constant 0 : index
    %130 = vector.load %arg3[%c0_90, %c0_91] : memref<12x100xf32, #tpu.memory_space<vmem>>, vector<12x100xf32>
    %cst = arith.constant dense<0.000000e+00> : vector<12x128xf32>
    %131 = tpu.matmul %130, %129, %cst {dimension_numbers = #tpu.dot_dimension_numbers<[1], [0], [0], [1], [0, 0, 1, 1], [], []>} : vector<12x100xf32>, vector<100x128xf32>, vector<12x128xf32> -> vector<12x128xf32>
    %c0_92 = arith.constant 0 : index
    %c0_93 = arith.constant 0 : index
    %132 = vector.load %arg4[%c0_92, %c0_93] : memref<12x1xf32, #tpu.memory_space<vmem>>, vector<12x1xf32>
    %133 = vector.broadcast %132 : vector<12x1xf32> to vector<12x128xf32>
    %134 = arith.addf %131, %133 : vector<12x128xf32>
    %cst_94 = arith.constant 0.000000e+00 : f32
    %135 = vector.broadcast %cst_94 : f32 to vector<12x128xf32>
    %136 = arith.maximumf %134, %135 : vector<12x128xf32>
    %137 = vector.shape_cast %136 : vector<12x128xf32> to vector<1x12x128xf32>
    %c0_95 = arith.constant 0 : index
    %c0_96 = arith.constant 0 : index
    %c0_97 = arith.constant 0 : index
    %138 = vector.load %arg5[%c0_95, %c0_96, %c0_97] : memref<1x12x128xf32, #tpu.memory_space<vmem>>, vector<1x12x128xf32>
    tpu.vector_store %arg5[%c0_95, %c0_96, %c0_97], %137 {strides = array<i32>} : memref<1x12x128xf32, #tpu.memory_space<vmem>>, vector<1x12x128xf32>,
    return
  }
  func.func @transform_0(%arg0: i32, %arg1: i32) -> (i32, i32, i32, i32) {
    %c0_i32 = arith.constant 0 : i32
    %c0_i32_0 = arith.constant 0 : i32
    %c0_i32_1 = arith.constant 0 : i32
    %c0_i32_2 = arith.constant 0 : i32
    return %arg0, %c0_i32, %c0_i32_0, %c0_i32_1 : i32, i32, i32, i32
  }
  func.func @transform_1(%arg0: i32, %arg1: i32) -> (i32, i32) {
    %c0_i32 = arith.constant 0 : i32
    %c0_i32_0 = arith.constant 0 : i32
    %c0_i32_1 = arith.constant 0 : i32
    return %c0_i32, %c0_i32_0 : i32, i32
  }
  func.func @transform_2(%arg0: i32, %arg1: i32) -> (i32, i32) {
    %c0_i32 = arith.constant 0 : i32
    %c0_i32_0 = arith.constant 0 : i32
    %c0_i32_1 = arith.constant 0 : i32
    return %c0_i32, %c0_i32_0 : i32, i32
  }
  func.func @transform_3(%arg0: i32, %arg1: i32) -> (i32, i32, i32) {
    %c0_i32 = arith.constant 0 : i32
    %c0_i32_0 = arith.constant 0 : i32
    return %arg0, %c0_i32, %arg1 : i32, i32, i32
  }
}

</mosaic_0001>

<llo_original>
// kernel: tpu_custom_call.1
$region0: #{tpu_custom_call.1}
  #allocation0 [shape = 'u32[]', space=smem, size = 0x4, offset = 0x4, fixed_abs, tag = 'smem constant byte address 0x4 - core index']
  #allocation1 [shape = 'u32[144,128]{1,0:T(1,128)}', space=vmem, size = 0x12000, scoped, tag = 'internal scratch']
  %s0 = inlined_call_operand.vmem [shape: f32[2,4,20,20], index: 0, kind: input, shape index: {}]
  %s1 = inlined_call_operand.vmem [shape: f32[12,100], index: 1, kind: input, shape index: {}]
  %s2 = inlined_call_operand.vmem [shape: f32[12,1], index: 2, kind: input, shape index: {}]
  %s3 = inlined_call_operand.vmem [shape: f32[2,12,256], index: 3, kind: output, shape index: {}]
  %s4 = sld [smem:[#allocation0]]
  $region79: #{tpu_custom_call.1} parent=0
    _
  %s6 = ssub.s32 1, %s4
  %s7 = scalar_select 0, %s6, %s4
  $region1: #{tpu_custom_call.1} parent=0
    #allocation2 [shape = 'u8[16384]{0}', space=vmem, size = 0x4000, scoped, tag = 'output window, operand 0']
    loop: start=0, step=1, limit=6
    $region2: #{tpu_custom_call.1} parent=1 // loop_pre_header
      _
    $region3: #{tpu_custom_call.1} parent=1 // loop_header
      %s9 = sphi 0, %s13
      %p10 = scmp.ge.s32.totalorder %s9, 6
      %s16 = sphi 0, %s28
      %s17 = sphi 0, %s24
      %s18 = sphi 0, %s16
      %s19 = sphi 0, %s17
      %s20 = sphi 0, %s18
      %s21 = sphi 0, %s19
      %s31 = sphi 0, %s33
      %s34 = sphi 0, %s31
      %s35 = sphi 0, %s34
      %s51 = sphi 0, %s35
      %s55 = sphi 0, %s55
      %s57 = sphi 0, %s55
      %s58 = sphi 0, %s57
      %s72 = sphi 0, %s58
      %s76 = sphi 0, %s76
      %s78 = sphi 0, %s76
      %s79 = sphi 0, %s78
      %s93 = sphi 0, %s79
      %s101 = sphi 0, %s103
      %s104 = sphi 0, %s101
      %s105 = sphi 0, %s104
      %s121 = sphi 0, %s105
    $region4: #{tpu_custom_call.1} parent=1 // loop_header_branch
      %12 = sbr.rel (%p10) target = $region8
    $region5: #{tpu_custom_call.1} parent=1 // loop_body
      %s14 = ssub.s32 %s9, 1
      %s15 = ssub.s32 %s9, 2
      %s22 = sadd.s32 1, %s17
      %p23 = scmp.ge.s32.totalorder %s22, 2
      %s24 = scalar_select %p23, 0, %s22
      %s25 = sadd.s32 1, %s16
      %s26 = scalar_select %p23, %s25, %s16
      %p27 = scmp.ge.s32.totalorder %s26, 2
      %s28 = scalar_select %p27, 0, %s26
      %s29 = ssub.s32 %s16, %s28
      %p30 = scmp.eq.s32.totalorder %s29, 0
      %s32 = sadd.s32 %s31, 1
      %s33 = scalar_select %p30, %s31, %s32
      %p36 = pneg %p30
      %p37 = scmp.eq.s32.totalorder %s9, 3
      %p38 = por %p36, %p37
      %p39 = scmp.ne.s32.totalorder %s31, %s34
      %p40 = scmp.eq.s32.totalorder %s9, 0
      %p41 = por %p39, %p40
      %p42 = scmp.ne.s32.totalorder %s31, %s34
      %p43 = scmp.eq.s32.totalorder %s14, 3
      %p44 = por %p42, %p43
      %p45 = scmp.ne.s32.totalorder %s34, %s35
      %p46 = scmp.eq.s32.totalorder %s14, 0
      %p47 = por %p45, %p46
      %p48 = scmp.ne.s32.totalorder %s34, %s35
      %p49 = scmp.eq.s32.totalorder %s15, 3
      %p50 = por %p48, %p49
      %p52 = scmp.ne.s32.totalorder %s35, %s51
      %p53 = scmp.eq.s32.totalorder %s15, 0
      %p54 = por %p52, %p53
      %s56 = sadd.s32 %s55, 1
      %p59 = scmp.eq.s32.totalorder %s9, 3
      %p60 = scmp.ne.s32.totalorder %s55, %s57
      %p61 = scmp.eq.s32.totalorder %s9, 0
      %p62 = por %p60, %p61
      %p63 = scmp.ne.s32.totalorder %s55, %s57
      %p64 = scmp.eq.s32.totalorder %s14, 3
      %p65 = por %p63, %p64
      %p66 = scmp.ne.s32.totalorder %s57, %s58
      %p67 = scmp.eq.s32.totalorder %s14, 0
      %p68 = por %p66, %p67
      %p69 = scmp.ne.s32.totalorder %s57, %s58
      %p70 = scmp.eq.s32.totalorder %s15, 3
      %p71 = por %p69, %p70
      %p73 = scmp.ne.s32.totalorder %s58, %s72
      %p74 = scmp.eq.s32.totalorder %s15, 0
      %p75 = por %p73, %p74
      %s77 = sadd.s32 %s76, 1
      %p80 = scmp.eq.s32.totalorder %s9, 3
      %p81 = scmp.ne.s32.totalorder %s76, %s78
      %p82 = scmp.eq.s32.totalorder %s9, 0
      %p83 = por %p81, %p82
      %p84 = scmp.ne.s32.totalorder %s76, %s78
      %p85 = scmp.eq.s32.totalorder %s14, 3
      %p86 = por %p84, %p85
      %p87 = scmp.ne.s32.totalorder %s78, %s79
      %p88 = scmp.eq.s32.totalorder %s14, 0
      %p89 = por %p87, %p88
      %p90 = scmp.ne.s32.totalorder %s78, %s79
      %p91 = scmp.eq.s32.totalorder %s15, 3
      %p92 = por %p90, %p91
      %p94 = scmp.ne.s32.totalorder %s79, %s93
      %p95 = scmp.eq.s32.totalorder %s15, 0
      %p96 = por %p94, %p95
      %s97 = ssub.s32 %s16, %s28
      %s98 = ssub.s32 %s17, %s24
      %s99 = sor.u32 %s97, %s98
      %p100 = scmp.eq.s32.totalorder %s99, 0
      %s102 = sadd.s32 %s101, 1
      %s103 = scalar_select %p100, %s101, %s102
      %p106 = pneg %p100
      %p107 = scmp.eq.s32.totalorder %s9, 3
      %p108 = por %p106, %p107
      %p109 = scmp.ne.s32.totalorder %s101, %s104
      %p110 = scmp.eq.s32.totalorder %s9, 0
      %p111 = por %p109, %p110
      %p112 = scmp.ne.s32.totalorder %s101, %s104
      %p113 = scmp.eq.s32.totalorder %s14, 3
      %p114 = por %p112, %p113
      %p115 = scmp.ne.s32.totalorder %s104, %s105
      %p116 = scmp.eq.s32.totalorder %s14, 0
      %p117 = por %p115, %p116
      %p118 = scmp.ne.s32.totalorder %s104, %s105
      %p119 = scmp.eq.s32.totalorder %s15, 3
      %p120 = por %p118, %p119
      %p122 = scmp.ne.s32.totalorder %s105, %s121
      %p123 = scmp.eq.s32.totalorder %s15, 0
      %p124 = por %p122, %p123
      %p125 = scmp.le.s32.totalorder 1, %s9
      %p126 = scmp.lt.s32.totalorder %s9, 5
      %p127 = pnand %p125, %p126
      %p128 = pneg %p127
      // Predicated region
      $region9: #{tpu_custom_call.1} parent=5 // pred_check
        _
      $region10: #{tpu_custom_call.1} parent=5 // pred_check_branch
        %130 = sbr.rel (%p127) target = $region12
      $region11: #{tpu_custom_call.1} parent=5 // pred_region
        %s131 = ssub.s32 %s9, 1
        // Predicated region
        $region13: #{tpu_custom_call.1} parent=11 // pred_check
          %p132 = pneg %p68
        $region14: #{tpu_custom_call.1} parent=11 // pred_check_branch
          %134 = sbr.rel (%p132) target = $region16
        $region15: #{tpu_custom_call.1} parent=11 // pred_region
          _
        $region16: #{tpu_custom_call.1} parent=11 // pred_fallthru
          _
        // Predicated region
        $region17: #{tpu_custom_call.1} parent=11 // pred_check
          %p135 = pneg %p89
        $region18: #{tpu_custom_call.1} parent=11 // pred_check_branch
          %137 = sbr.rel (%p135) target = $region20
        $region19: #{tpu_custom_call.1} parent=11 // pred_region
          _
        $region20: #{tpu_custom_call.1} parent=11 // pred_fallthru
          _
      $region12: #{tpu_custom_call.1} parent=5 // pred_fallthru
        _
      %p138 = scmp.lt.s32.totalorder %s9, 4
      // Predicated region
      $region21: #{tpu_custom_call.1} parent=5 // pred_check
        %p139 = pneg %p138
      $region22: #{tpu_custom_call.1} parent=5 // pred_check_branch
        %141 = sbr.rel (%p139) target = $region24
      $region23: #{tpu_custom_call.1} parent=5 // pred_region
        // Predicated region
        $region25: #{tpu_custom_call.1} parent=23 // pred_check
          %p142 = pneg %p41
        $region26: #{tpu_custom_call.1} parent=23 // pred_check_branch
          %144 = sbr.rel (%p142) target = $region28
        $region27: #{tpu_custom_call.1} parent=23 // pred_region
          %p145 = scmp.lt.s32.totalorder %s16, 1
          %s146 = scalar_select %p145, %s16, 1
          %s147 = smul.addr %s146, 12
          %s148 = smul.addr %s147, 8
          %s149 = scalar_lea.vmem %s0, %s148
        $region28: #{tpu_custom_call.1} parent=23 // pred_fallthru
          _
      $region24: #{tpu_custom_call.1} parent=5 // pred_fallthru
        _
      %p150 = scmp.le.s32.totalorder 1, %s9
      %p151 = scmp.lt.s32.totalorder %s9, 5
      %p152 = pnand %p150, %p151
      %p153 = pneg %p152
      // Predicated region
      $region29: #{tpu_custom_call.1} parent=5 // pred_check
        _
      $region30: #{tpu_custom_call.1} parent=5 // pred_check_branch
        %155 = sbr.rel (%p152) target = $region32
      $region31: #{tpu_custom_call.1} parent=5 // pred_region
        %s156 = ssub.s32 %s9, 1
        %p157 = scmp.lt.s32.totalorder %s18, 1
        %s158 = scalar_select %p157, %s18, 1
        %s159 = smul.addr %s158, 12
        %s160 = smul.addr %s159, 8
        %s161 = scalar_lea.vmem %s0, %s160
        %p162 = pneg %p47
        %p163 = pneg %p44
        %p164 = pneg %p68
        %p165 = pneg %p65
        %p166 = pneg %p89
        %p167 = pneg %p86
        %p168 = pneg %p117
        %p169 = pneg %p114
        %s170 = sand.u32 %s104, 1
        %s171 = sand.u32 %s104, 1
        %s172 = smul.addr %s171, 16
        %s173 = scalar_lea.vmem [#allocation2], %s172
        %p174 = scmp.lt.s32.totalorder %s18, 1
        %s175 = scalar_select %p174, %s18, 1
        %s176 = smul.addr %s175, 12
        %s177 = smul.addr %s176, 8
        %s178 = scalar_lea.vmem %s0, %s177
        %s179 = smul.u32 %s19, 8
        %s180 = scalar_lea.vmem %s178, %s179
        %v181 = vld [vmem:[%s180] sm:$0xff]
        %v182 = vld [vmem:[%s180 + $0x18] sm:$0xff]
        %v183 = vld [vmem:[%s180 + $0x30] sm:$0xff]
        %v184 = vld [vmem:[%s180 + $0x48] sm:$0xff]
        %v185 = vcombine.low %v181, %v183
        %v186 = vcombine.high %v181, %v183
        %v188 = vunpack.c.l.s4 1983009808
        %v189 = vunpack.c.0.s8 %v188
        %v190 = vlaneseq
        %v191 = vshrl.u32 %v190, 7
        %v192 = vsub.s32 %v189, %v191
        %v193 = vrot.slane %v185, %v192
        %v195 = vunpack.c.l.s4 1983009808
        %v196 = vunpack.c.0.s8 %v195
        %v197 = vlaneseq
        %v198 = vshrl.u32 %v197, 7
        %v199 = vsub.s32 %v196, %v198
        %v200 = vrot.slane %v186, %v199
        %v201 = vcombine.low %v182, %v184
        %v202 = vcombine.high %v182, %v184
        %v204 = vunpack.c.l.s4 1983009808
        %v205 = vunpack.c.0.s8 %v204
        %v206 = vlaneseq
        %v207 = vshrl.u32 %v206, 7
        %v208 = vsub.s32 %v205, %v207
        %v209 = vrot.slane %v201, %v208
        %v211 = vunpack.c.l.s4 1983009808
        %v212 = vunpack.c.0.s8 %v211
        %v213 = vlaneseq
        %v214 = vshrl.u32 %v213, 7
        %v215 = vsub.s32 %v212, %v214
        %v216 = vrot.slane %v202, %v215
        %v217 = vcombine.low %v193, %v209
        %v218 = vcombine.high %v193, %v209
        %v220 = vunpack.c.l.s4 1934713408
        %v221 = vunpack.c.0.s8 %v220
        %v222 = vlaneseq
        %v223 = vshrl.u32 %v222, 7
        %v224 = vsub.s32 %v221, %v223
        %v225 = vrot.slane %v217, %v224
        %v227 = vunpack.c.l.s4 1934713408
        %v228 = vunpack.c.0.s8 %v227
        %v229 = vlaneseq
        %v230 = vshrl.u32 %v229, 7
        %v231 = vsub.s32 %v228, %v230
        %v232 = vrot.slane %v218, %v231
        %v233 = vcombine.low %v200, %v216
        %v234 = vcombine.high %v200, %v216
        %v236 = vunpack.c.l.s4 1934713408
        %v237 = vunpack.c.0.s8 %v236
        %v238 = vlaneseq
        %v239 = vshrl.u32 %v238, 7
        %v240 = vsub.s32 %v237, %v239
        %v241 = vrot.slane %v233, %v240
        %v243 = vunpack.c.l.s4 1934713408
        %v244 = vunpack.c.0.s8 %v243
        %v245 = vlaneseq
        %v246 = vshrl.u32 %v245, 7
        %v247 = vsub.s32 %v244, %v246
        %v248 = vrot.slane %v234, %v247
        %v249 = vcombine.high %v225, 0.0
        %v250 = vcombine.high %v232, 0.0
        %v251 = vcombine.high %v241, 0.0
        %v252 = vcombine.high %v248, 0.0
        %254 = vrot.lane.b32.xlu0 %v249, 16
        %v255 = vpop.permute.xlu0 %254
        %258 = vrot.lane.b32.xlu0 %v232, 32
        %v259 = vpop.permute.xlu0 %258
        %262 = vrot.lane.b32.xlu0 %v250, 48
        %v263 = vpop.permute.xlu0 %262
        %266 = vrot.lane.b32.xlu0 %v241, 64
        %v267 = vpop.permute.xlu0 %266
        %270 = vrot.lane.b32.xlu0 %v251, 80
        %v271 = vpop.permute.xlu0 %270
        %274 = vrot.lane.b32.xlu0 %v248, 96
        %v275 = vpop.permute.xlu0 %274
        %278 = vrot.lane.b32.xlu0 %v252, 112
        %v279 = vpop.permute.xlu0 %278
        %vm281 = vcmask 130048
        %v282 = vsel %vm281, %v225, %v255
        %vm283 = vcmask 261120
        %v284 = vsel %vm283, %v282, %v259
        %vm285 = vcmask 392192
        %v286 = vsel %vm285, %v284, %v263
        %vm287 = vcmask 523264
        %v288 = vsel %vm287, %v286, %v267
        %vm289 = vcmask 654336
        %v290 = vsel %vm289, %v288, %v271
        %vm291 = vcmask 785408
        %v292 = vsel %vm291, %v290, %v275
        %vm293 = vcmask 916480
        %v294 = vsel %vm293, %v292, %v279
        %299 = vrot.lane.b32.xlu0 %v181, 127
        %v300 = vpop.permute.xlu0 %299
        %301 = vrot.lane.b32.xlu0 %v182, 127
        %v302 = vpop.permute.xlu0 %301
        %303 = vrot.lane.b32.xlu0 %v183, 127
        %v304 = vpop.permute.xlu0 %303
        %305 = vrot.lane.b32.xlu0 %v184, 127
        %v306 = vpop.permute.xlu0 %305
        %v311 = vcombine.low %v300, %v304
        %v312 = vcombine.high %v300, %v304
        %v314 = vunpack.c.l.s4 1983009808
        %v315 = vunpack.c.0.s8 %v314
        %v316 = vlaneseq
        %v317 = vshrl.u32 %v316, 7
        %v318 = vsub.s32 %v315, %v317
        %v319 = vrot.slane %v311, %v318
        %v321 = vunpack.c.l.s4 1983009808
        %v322 = vunpack.c.0.s8 %v321
        %v323 = vlaneseq
        %v324 = vshrl.u32 %v323, 7
        %v325 = vsub.s32 %v322, %v324
        %v326 = vrot.slane %v312, %v325
        %v327 = vcombine.low %v302, %v306
        %v328 = vcombine.high %v302, %v306
        %v330 = vunpack.c.l.s4 1983009808
        %v331 = vunpack.c.0.s8 %v330
        %v332 = vlaneseq
        %v333 = vshrl.u32 %v332, 7
        %v334 = vsub.s32 %v331, %v333
        %v335 = vrot.slane %v327, %v334
        %v337 = vunpack.c.l.s4 1983009808
        %v338 = vunpack.c.0.s8 %v337
        %v339 = vlaneseq
        %v340 = vshrl.u32 %v339, 7
        %v341 = vsub.s32 %v338, %v340
        %v342 = vrot.slane %v328, %v341
        %v343 = vcombine.low %v319, %v335
        %v344 = vcombine.high %v319, %v335
        %v346 = vunpack.c.l.s4 1934713408
        %v347 = vunpack.c.0.s8 %v346
        %v348 = vlaneseq
        %v349 = vshrl.u32 %v348, 7
        %v350 = vsub.s32 %v347, %v349
        %v351 = vrot.slane %v343, %v350
        %v353 = vunpack.c.l.s4 1934713408
        %v354 = vunpack.c.0.s8 %v353
        %v355 = vlaneseq
        %v356 = vshrl.u32 %v355, 7
        %v357 = vsub.s32 %v354, %v356
        %v358 = vrot.slane %v344, %v357
        %v359 = vcombine.low %v326, %v342
        %v360 = vcombine.high %v326, %v342
        %v362 = vunpack.c.l.s4 1934713408
        %v363 = vunpack.c.0.s8 %v362
        %v364 = vlaneseq
        %v365 = vshrl.u32 %v364, 7
        %v366 = vsub.s32 %v363, %v365
        %v367 = vrot.slane %v359, %v366
        %v369 = vunpack.c.l.s4 1934713408
        %v370 = vunpack.c.0.s8 %v369
        %v371 = vlaneseq
        %v372 = vshrl.u32 %v371, 7
        %v373 = vsub.s32 %v370, %v372
        %v374 = vrot.slane %v360, %v373
        %v375 = vcombine.high %v351, 0.0
        %v376 = vcombine.high %v358, 0.0
        %v377 = vcombine.high %v367, 0.0
        %v378 = vcombine.high %v374, 0.0
        %380 = vrot.lane.b32.xlu0 %v375, 16
        %v381 = vpop.permute.xlu0 %380
        %384 = vrot.lane.b32.xlu0 %v358, 32
        %v385 = vpop.permute.xlu0 %384
        %388 = vrot.lane.b32.xlu0 %v376, 48
        %v389 = vpop.permute.xlu0 %388
        %392 = vrot.lane.b32.xlu0 %v367, 64
        %v393 = vpop.permute.xlu0 %392
        %396 = vrot.lane.b32.xlu0 %v377, 80
        %v397 = vpop.permute.xlu0 %396
        %400 = vrot.lane.b32.xlu0 %v374, 96
        %v401 = vpop.permute.xlu0 %400
        %404 = vrot.lane.b32.xlu0 %v378, 112
        %v405 = vpop.permute.xlu0 %404
        %v407 = vsel %vm281, %v351, %v381
        %v408 = vsel %vm283, %v407, %v385
        %v409 = vsel %vm285, %v408, %v389
        %v410 = vsel %vm287, %v409, %v393
        %v411 = vsel %vm289, %v410, %v397
        %v412 = vsel %vm291, %v411, %v401
        %v413 = vsel %vm293, %v412, %v405
        %414 = vrot.lane.b32.xlu0 %v181, 126
        %v415 = vpop.permute.xlu0 %414
        %416 = vrot.lane.b32.xlu0 %v182, 126
        %v417 = vpop.permute.xlu0 %416
        %418 = vrot.lane.b32.xlu0 %v183, 126
        %v419 = vpop.permute.xlu0 %418
        %420 = vrot.lane.b32.xlu0 %v184, 126
        %v421 = vpop.permute.xlu0 %420
        %v426 = vcombine.low %v415, %v419
        %v427 = vcombine.high %v415, %v419
        %v429 = vunpack.c.l.s4 1983009808
        %v430 = vunpack.c.0.s8 %v429
        %v431 = vlaneseq
        %v432 = vshrl.u32 %v431, 7
        %v433 = vsub.s32 %v430, %v432
        %v434 = vrot.slane %v426, %v433
        %v436 = vunpack.c.l.s4 1983009808
        %v437 = vunpack.c.0.s8 %v436
        %v438 = vlaneseq
        %v439 = vshrl.u32 %v438, 7
        %v440 = vsub.s32 %v437, %v439
        %v441 = vrot.slane %v427, %v440
        %v442 = vcombine.low %v417, %v421
        %v443 = vcombine.high %v417, %v421
        %v445 = vunpack.c.l.s4 1983009808
        %v446 = vunpack.c.0.s8 %v445
        %v447 = vlaneseq
        %v448 = vshrl.u32 %v447, 7
        %v449 = vsub.s32 %v446, %v448
        %v450 = vrot.slane %v442, %v449
        %v452 = vunpack.c.l.s4 1983009808
        %v453 = vunpack.c.0.s8 %v452
        %v454 = vlaneseq
        %v455 = vshrl.u32 %v454, 7
        %v456 = vsub.s32 %v453, %v455
        %v457 = vrot.slane %v443, %v456
        %v458 = vcombine.low %v434, %v450
        %v459 = vcombine.high %v434, %v450
        %v461 = vunpack.c.l.s4 1934713408
        %v462 = vunpack.c.0.s8 %v461
        %v463 = vlaneseq
        %v464 = vshrl.u32 %v463, 7
        %v465 = vsub.s32 %v462, %v464
        %v466 = vrot.slane %v458, %v465
        %v468 = vunpack.c.l.s4 1934713408
        %v469 = vunpack.c.0.s8 %v468
        %v470 = vlaneseq
        %v471 = vshrl.u32 %v470, 7
        %v472 = vsub.s32 %v469, %v471
        %v473 = vrot.slane %v459, %v472
        %v474 = vcombine.low %v441, %v457
        %v475 = vcombine.high %v441, %v457
        %v477 = vunpack.c.l.s4 1934713408
        %v478 = vunpack.c.0.s8 %v477
        %v479 = vlaneseq
        %v480 = vshrl.u32 %v479, 7
        %v481 = vsub.s32 %v478, %v480
        %v482 = vrot.slane %v474, %v481
        %v484 = vunpack.c.l.s4 1934713408
        %v485 = vunpack.c.0.s8 %v484
        %v486 = vlaneseq
        %v487 = vshrl.u32 %v486, 7
        %v488 = vsub.s32 %v485, %v487
        %v489 = vrot.slane %v475, %v488
        %v490 = vcombine.high %v466, 0.0
        %v491 = vcombine.high %v473, 0.0
        %v492 = vcombine.high %v482, 0.0
        %v493 = vcombine.high %v489, 0.0
        %495 = vrot.lane.b32.xlu0 %v490, 16
        %v496 = vpop.permute.xlu0 %495
        %499 = vrot.lane.b32.xlu0 %v473, 32
        %v500 = vpop.permute.xlu0 %499
        %503 = vrot.lane.b32.xlu0 %v491, 48
        %v504 = vpop.permute.xlu0 %503
        %507 = vrot.lane.b32.xlu0 %v482, 64
        %v508 = vpop.permute.xlu0 %507
        %511 = vrot.lane.b32.xlu0 %v492, 80
        %v512 = vpop.permute.xlu0 %511
        %515 = vrot.lane.b32.xlu0 %v489, 96
        %v516 = vpop.permute.xlu0 %515
        %519 = vrot.lane.b32.xlu0 %v493, 112
        %v520 = vpop.permute.xlu0 %519
        %v522 = vsel %vm281, %v466, %v496
        %v523 = vsel %vm283, %v522, %v500
        %v524 = vsel %vm285, %v523, %v504
        %v525 = vsel %vm287, %v524, %v508
        %v526 = vsel %vm289, %v525, %v512
        %v527 = vsel %vm291, %v526, %v516
        %v528 = vsel %vm293, %v527, %v520
        %529 = vrot.lane.b32.xlu0 %v181, 125
        %v530 = vpop.permute.xlu0 %529
        %531 = vrot.lane.b32.xlu0 %v182, 125
        %v532 = vpop.permute.xlu0 %531
        %533 = vrot.lane.b32.xlu0 %v183, 125
        %v534 = vpop.permute.xlu0 %533
        %535 = vrot.lane.b32.xlu0 %v184, 125
        %v536 = vpop.permute.xlu0 %535
        %v541 = vcombine.low %v530, %v534
        %v542 = vcombine.high %v530, %v534
        %v544 = vunpack.c.l.s4 1983009808
        %v545 = vunpack.c.0.s8 %v544
        %v546 = vlaneseq
        %v547 = vshrl.u32 %v546, 7
        %v548 = vsub.s32 %v545, %v547
        %v549 = vrot.slane %v541, %v548
        %v551 = vunpack.c.l.s4 1983009808
        %v552 = vunpack.c.0.s8 %v551
        %v553 = vlaneseq
        %v554 = vshrl.u32 %v553, 7
        %v555 = vsub.s32 %v552, %v554
        %v556 = vrot.slane %v542, %v555
        %v557 = vcombine.low %v532, %v536
        %v558 = vcombine.high %v532, %v536
        %v560 = vunpack.c.l.s4 1983009808
        %v561 = vunpack.c.0.s8 %v560
        %v562 = vlaneseq
        %v563 = vshrl.u32 %v562, 7
        %v564 = vsub.s32 %v561, %v563
        %v565 = vrot.slane %v557, %v564
        %v567 = vunpack.c.l.s4 1983009808
        %v568 = vunpack.c.0.s8 %v567
        %v569 = vlaneseq
        %v570 = vshrl.u32 %v569, 7
        %v571 = vsub.s32 %v568, %v570
        %v572 = vrot.slane %v558, %v571
        %v573 = vcombine.low %v549, %v565
        %v574 = vcombine.high %v549, %v565
        %v576 = vunpack.c.l.s4 1934713408
        %v577 = vunpack.c.0.s8 %v576
        %v578 = vlaneseq
        %v579 = vshrl.u32 %v578, 7
        %v580 = vsub.s32 %v577, %v579
        %v581 = vrot.slane %v573, %v580
        %v583 = vunpack.c.l.s4 1934713408
        %v584 = vunpack.c.0.s8 %v583
        %v585 = vlaneseq
        %v586 = vshrl.u32 %v585, 7
        %v587 = vsub.s32 %v584, %v586
        %v588 = vrot.slane %v574, %v587
        %v589 = vcombine.low %v556, %v572
        %v590 = vcombine.high %v556, %v572
        %v592 = vunpack.c.l.s4 1934713408
        %v593 = vunpack.c.0.s8 %v592
        %v594 = vlaneseq
        %v595 = vshrl.u32 %v594, 7
        %v596 = vsub.s32 %v593, %v595
        %v597 = vrot.slane %v589, %v596
        %v599 = vunpack.c.l.s4 1934713408
        %v600 = vunpack.c.0.s8 %v599
        %v601 = vlaneseq
        %v602 = vshrl.u32 %v601, 7
        %v603 = vsub.s32 %v600, %v602
        %v604 = vrot.slane %v590, %v603
        %v605 = vcombine.high %v581, 0.0
        %v606 = vcombine.high %v588, 0.0
        %v607 = vcombine.high %v597, 0.0
        %v608 = vcombine.high %v604, 0.0
        %610 = vrot.lane.b32.xlu0 %v605, 16
        %v611 = vpop.permute.xlu0 %610
        %614 = vrot.lane.b32.xlu0 %v588, 32
        %v615 = vpop.permute.xlu0 %614
        %618 = vrot.lane.b32.xlu0 %v606, 48
        %v619 = vpop.permute.xlu0 %618
        %622 = vrot.lane.b32.xlu0 %v597, 64
        %v623 = vpop.permute.xlu0 %622
        %626 = vrot.lane.b32.xlu0 %v607, 80
        %v627 = vpop.permute.xlu0 %626
        %630 = vrot.lane.b32.xlu0 %v604, 96
        %v631 = vpop.permute.xlu0 %630
        %634 = vrot.lane.b32.xlu0 %v608, 112
        %v635 = vpop.permute.xlu0 %634
        %v637 = vsel %vm281, %v581, %v611
        %v638 = vsel %vm283, %v637, %v615
        %v639 = vsel %vm285, %v638, %v619
        %v640 = vsel %vm287, %v639, %v623
        %v641 = vsel %vm289, %v640, %v627
        %v642 = vsel %vm291, %v641, %v631
        %v643 = vsel %vm293, %v642, %v635
        %644 = vrot.lane.b32.xlu0 %v181, 124
        %v645 = vpop.permute.xlu0 %644
        %646 = vrot.lane.b32.xlu0 %v182, 124
        %v647 = vpop.permute.xlu0 %646
        %648 = vrot.lane.b32.xlu0 %v183, 124
        %v649 = vpop.permute.xlu0 %648
        %650 = vrot.lane.b32.xlu0 %v184, 124
        %v651 = vpop.permute.xlu0 %650
        %v656 = vcombine.low %v645, %v649
        %v657 = vcombine.high %v645, %v649
        %v659 = vunpack.c.l.s4 1983009808
        %v660 = vunpack.c.0.s8 %v659
        %v661 = vlaneseq
        %v662 = vshrl.u32 %v661, 7
        %v663 = vsub.s32 %v660, %v662
        %v664 = vrot.slane %v656, %v663
        %v666 = vunpack.c.l.s4 1983009808
        %v667 = vunpack.c.0.s8 %v666
        %v668 = vlaneseq
        %v669 = vshrl.u32 %v668, 7
        %v670 = vsub.s32 %v667, %v669
        %v671 = vrot.slane %v657, %v670
        %v672 = vcombine.low %v647, %v651
        %v673 = vcombine.high %v647, %v651
        %v675 = vunpack.c.l.s4 1983009808
        %v676 = vunpack.c.0.s8 %v675
        %v677 = vlaneseq
        %v678 = vshrl.u32 %v677, 7
        %v679 = vsub.s32 %v676, %v678
        %v680 = vrot.slane %v672, %v679
        %v682 = vunpack.c.l.s4 1983009808
        %v683 = vunpack.c.0.s8 %v682
        %v684 = vlaneseq
        %v685 = vshrl.u32 %v684, 7
        %v686 = vsub.s32 %v683, %v685
        %v687 = vrot.slane %v673, %v686
        %v688 = vcombine.low %v664, %v680
        %v689 = vcombine.high %v664, %v680
        %v691 = vunpack.c.l.s4 1934713408
        %v692 = vunpack.c.0.s8 %v691
        %v693 = vlaneseq
        %v694 = vshrl.u32 %v693, 7
        %v695 = vsub.s32 %v692, %v694
        %v696 = vrot.slane %v688, %v695
        %v698 = vunpack.c.l.s4 1934713408
        %v699 = vunpack.c.0.s8 %v698
        %v700 = vlaneseq
        %v701 = vshrl.u32 %v700, 7
        %v702 = vsub.s32 %v699, %v701
        %v703 = vrot.slane %v689, %v702
        %v704 = vcombine.low %v671, %v687
        %v705 = vcombine.high %v671, %v687
        %v707 = vunpack.c.l.s4 1934713408
        %v708 = vunpack.c.0.s8 %v707
        %v709 = vlaneseq
        %v710 = vshrl.u32 %v709, 7
        %v711 = vsub.s32 %v708, %v710
        %v712 = vrot.slane %v704, %v711
        %v714 = vunpack.c.l.s4 1934713408
        %v715 = vunpack.c.0.s8 %v714
        %v716 = vlaneseq
        %v717 = vshrl.u32 %v716, 7
        %v718 = vsub.s32 %v715, %v717
        %v719 = vrot.slane %v705, %v718
        %v720 = vcombine.high %v696, 0.0
        %v721 = vcombine.high %v703, 0.0
        %v722 = vcombine.high %v712, 0.0
        %v723 = vcombine.high %v719, 0.0
        %725 = vrot.lane.b32.xlu0 %v720, 16
        %v726 = vpop.permute.xlu0 %725
        %729 = vrot.lane.b32.xlu0 %v703, 32
        %v730 = vpop.permute.xlu0 %729
        %733 = vrot.lane.b32.xlu0 %v721, 48
        %v734 = vpop.permute.xlu0 %733
        %737 = vrot.lane.b32.xlu0 %v712, 64
        %v738 = vpop.permute.xlu0 %737
        %741 = vrot.lane.b32.xlu0 %v722, 80
        %v742 = vpop.permute.xlu0 %741
        %745 = vrot.lane.b32.xlu0 %v719, 96
        %v746 = vpop.permute.xlu0 %745
        %749 = vrot.lane.b32.xlu0 %v723, 112
        %v750 = vpop.permute.xlu0 %749
        %v752 = vsel %vm281, %v696, %v726
        %v753 = vsel %vm283, %v752, %v730
        %v754 = vsel %vm285, %v753, %v734
        %v755 = vsel %vm287, %v754, %v738
        %v756 = vsel %vm289, %v755, %v742
        %v757 = vsel %vm291, %v756, %v746
        %v758 = vsel %vm293, %v757, %v750
        %s759 = sadd.s32 %s179, 1
        %s760 = scalar_lea.vmem %s178, %s759
        %v761 = vld [vmem:[%s760] sm:$0xff]
        %v762 = vld [vmem:[%s760 + $0x18] sm:$0xff]
        %v763 = vld [vmem:[%s760 + $0x30] sm:$0xff]
        %v764 = vld [vmem:[%s760 + $0x48] sm:$0xff]
        %v765 = vcombine.low %v761, %v763
        %v766 = vcombine.high %v761, %v763
        %v768 = vunpack.c.l.s4 1983009808
        %v769 = vunpack.c.0.s8 %v768
        %v770 = vlaneseq
        %v771 = vshrl.u32 %v770, 7
        %v772 = vsub.s32 %v769, %v771
        %v773 = vrot.slane %v765, %v772
        %v775 = vunpack.c.l.s4 1983009808
        %v776 = vunpack.c.0.s8 %v775
        %v777 = vlaneseq
        %v778 = vshrl.u32 %v777, 7
        %v779 = vsub.s32 %v776, %v778
        %v780 = vrot.slane %v766, %v779
        %v781 = vcombine.low %v762, %v764
        %v782 = vcombine.high %v762, %v764
        %v784 = vunpack.c.l.s4 1983009808
        %v785 = vunpack.c.0.s8 %v784
        %v786 = vlaneseq
        %v787 = vshrl.u32 %v786, 7
        %v788 = vsub.s32 %v785, %v787
        %v789 = vrot.slane %v781, %v788
        %v791 = vunpack.c.l.s4 1983009808
        %v792 = vunpack.c.0.s8 %v791
        %v793 = vlaneseq
        %v794 = vshrl.u32 %v793, 7
        %v795 = vsub.s32 %v792, %v794
        %v796 = vrot.slane %v782, %v795
        %v797 = vcombine.low %v773, %v789
        %v798 = vcombine.high %v773, %v789
        %v800 = vunpack.c.l.s4 1934713408
        %v801 = vunpack.c.0.s8 %v800
        %v802 = vlaneseq
        %v803 = vshrl.u32 %v802, 7
        %v804 = vsub.s32 %v801, %v803
        %v805 = vrot.slane %v797, %v804
        %v807 = vunpack.c.l.s4 1934713408
        %v808 = vunpack.c.0.s8 %v807
        %v809 = vlaneseq
        %v810 = vshrl.u32 %v809, 7
        %v811 = vsub.s32 %v808, %v810
        %v812 = vrot.slane %v798, %v811
        %v813 = vcombine.low %v780, %v796
        %v814 = vcombine.high %v780, %v796
        %v816 = vunpack.c.l.s4 1934713408
        %v817 = vunpack.c.0.s8 %v816
        %v818 = vlaneseq
        %v819 = vshrl.u32 %v818, 7
        %v820 = vsub.s32 %v817, %v819
        %v821 = vrot.slane %v813, %v820
        %v823 = vunpack.c.l.s4 1934713408
        %v824 = vunpack.c.0.s8 %v823
        %v825 = vlaneseq
        %v826 = vshrl.u32 %v825, 7
        %v827 = vsub.s32 %v824, %v826
        %v828 = vrot.slane %v814, %v827
        %v829 = vcombine.high %v805, 0.0
        %v830 = vcombine.high %v812, 0.0
        %v831 = vcombine.high %v821, 0.0
        %v832 = vcombine.high %v828, 0.0
        %834 = vrot.lane.b32.xlu0 %v829, 16
        %v835 = vpop.permute.xlu0 %834
        %838 = vrot.lane.b32.xlu0 %v812, 32
        %v839 = vpop.permute.xlu0 %838
        %842 = vrot.lane.b32.xlu0 %v830, 48
        %v843 = vpop.permute.xlu0 %842
        %846 = vrot.lane.b32.xlu0 %v821, 64
        %v847 = vpop.permute.xlu0 %846
        %850 = vrot.lane.b32.xlu0 %v831, 80
        %v851 = vpop.permute.xlu0 %850
        %854 = vrot.lane.b32.xlu0 %v828, 96
        %v855 = vpop.permute.xlu0 %854
        %858 = vrot.lane.b32.xlu0 %v832, 112
        %v859 = vpop.permute.xlu0 %858
        %v861 = vsel %vm281, %v805, %v835
        %v862 = vsel %vm283, %v861, %v839
        %v863 = vsel %vm285, %v862, %v843
        %v864 = vsel %vm287, %v863, %v847
        %v865 = vsel %vm289, %v864, %v851
        %v866 = vsel %vm291, %v865, %v855
        %v867 = vsel %vm293, %v866, %v859
        %872 = vrot.lane.b32.xlu0 %v761, 127
        %v873 = vpop.permute.xlu0 %872
        %874 = vrot.lane.b32.xlu0 %v762, 127
        %v875 = vpop.permute.xlu0 %874
        %876 = vrot.lane.b32.xlu0 %v763, 127
        %v877 = vpop.permute.xlu0 %876
        %878 = vrot.lane.b32.xlu0 %v764, 127
        %v879 = vpop.permute.xlu0 %878
        %v884 = vcombine.low %v873, %v877
        %v885 = vcombine.high %v873, %v877
        %v887 = vunpack.c.l.s4 1983009808
        %v888 = vunpack.c.0.s8 %v887
        %v889 = vlaneseq
        %v890 = vshrl.u32 %v889, 7
        %v891 = vsub.s32 %v888, %v890
        %v892 = vrot.slane %v884, %v891
        %v894 = vunpack.c.l.s4 1983009808
        %v895 = vunpack.c.0.s8 %v894
        %v896 = vlaneseq
        %v897 = vshrl.u32 %v896, 7
        %v898 = vsub.s32 %v895, %v897
        %v899 = vrot.slane %v885, %v898
        %v900 = vcombine.low %v875, %v879
        %v901 = vcombine.high %v875, %v879
        %v903 = vunpack.c.l.s4 1983009808
        %v904 = vunpack.c.0.s8 %v903
        %v905 = vlaneseq
        %v906 = vshrl.u32 %v905, 7
        %v907 = vsub.s32 %v904, %v906
        %v908 = vrot.slane %v900, %v907
        %v910 = vunpack.c.l.s4 1983009808
        %v911 = vunpack.c.0.s8 %v910
        %v912 = vlaneseq
        %v913 = vshrl.u32 %v912, 7
        %v914 = vsub.s32 %v911, %v913
        %v915 = vrot.slane %v901, %v914
        %v916 = vcombine.low %v892, %v908
        %v917 = vcombine.high %v892, %v908
        %v919 = vunpack.c.l.s4 1934713408
        %v920 = vunpack.c.0.s8 %v919
        %v921 = vlaneseq
        %v922 = vshrl.u32 %v921, 7
        %v923 = vsub.s32 %v920, %v922
        %v924 = vrot.slane %v916, %v923
        %v926 = vunpack.c.l.s4 1934713408
        %v927 = vunpack.c.0.s8 %v926
        %v928 = vlaneseq
        %v929 = vshrl.u32 %v928, 7
        %v930 = vsub.s32 %v927, %v929
        %v931 = vrot.slane %v917, %v930
        %v932 = vcombine.low %v899, %v915
        %v933 = vcombine.high %v899, %v915
        %v935 = vunpack.c.l.s4 1934713408
        %v936 = vunpack.c.0.s8 %v935
        %v937 = vlaneseq
        %v938 = vshrl.u32 %v937, 7
        %v939 = vsub.s32 %v936, %v938
        %v940 = vrot.slane %v932, %v939
        %v942 = vunpack.c.l.s4 1934713408
        %v943 = vunpack.c.0.s8 %v942
        %v944 = vlaneseq
        %v945 = vshrl.u32 %v944, 7
        %v946 = vsub.s32 %v943, %v945
        %v947 = vrot.slane %v933, %v946
        %v948 = vcombine.high %v924, 0.0
        %v949 = vcombine.high %v931, 0.0
        %v950 = vcombine.high %v940, 0.0
        %v951 = vcombine.high %v947, 0.0
        %953 = vrot.lane.b32.xlu0 %v948, 16
        %v954 = vpop.permute.xlu0 %953
        %957 = vrot.lane.b32.xlu0 %v931, 32
        %v958 = vpop.permute.xlu0 %957
        %961 = vrot.lane.b32.xlu0 %v949, 48
        %v962 = vpop.permute.xlu0 %961
        %965 = vrot.lane.b32.xlu0 %v940, 64
        %v966 = vpop.permute.xlu0 %965
        %969 = vrot.lane.b32.xlu0 %v950, 80
        %v970 = vpop.permute.xlu0 %969
        %973 = vrot.lane.b32.xlu0 %v947, 96
        %v974 = vpop.permute.xlu0 %973
        %977 = vrot.lane.b32.xlu0 %v951, 112
        %v978 = vpop.permute.xlu0 %977
        %v980 = vsel %vm281, %v924, %v954
        %v981 = vsel %vm283, %v980, %v958
        %v982 = vsel %vm285, %v981, %v962
        %v983 = vsel %vm287, %v982, %v966
        %v984 = vsel %vm289, %v983, %v970
        %v985 = vsel %vm291, %v984, %v974
        %v986 = vsel %vm293, %v985, %v978
        %987 = vrot.lane.b32.xlu0 %v761, 126
        %v988 = vpop.permute.xlu0 %987
        %989 = vrot.lane.b32.xlu0 %v762, 126
        %v990 = vpop.permute.xlu0 %989
        %991 = vrot.lane.b32.xlu0 %v763, 126
        %v992 = vpop.permute.xlu0 %991
        %993 = vrot.lane.b32.xlu0 %v764, 126
        %v994 = vpop.permute.xlu0 %993
        %v999 = vcombine.low %v988, %v992
        %v1000 = vcombine.high %v988, %v992
        %v1002 = vunpack.c.l.s4 1983009808
        %v1003 = vunpack.c.0.s8 %v1002
        %v1004 = vlaneseq
        %v1005 = vshrl.u32 %v1004, 7
        %v1006 = vsub.s32 %v1003, %v1005
        %v1007 = vrot.slane %v999, %v1006
        %v1009 = vunpack.c.l.s4 1983009808
        %v1010 = vunpack.c.0.s8 %v1009
        %v1011 = vlaneseq
        %v1012 = vshrl.u32 %v1011, 7
        %v1013 = vsub.s32 %v1010, %v1012
        %v1014 = vrot.slane %v1000, %v1013
        %v1015 = vcombine.low %v990, %v994
        %v1016 = vcombine.high %v990, %v994
        %v1018 = vunpack.c.l.s4 1983009808
        %v1019 = vunpack.c.0.s8 %v1018
        %v1020 = vlaneseq
        %v1021 = vshrl.u32 %v1020, 7
        %v1022 = vsub.s32 %v1019, %v1021
        %v1023 = vrot.slane %v1015, %v1022
        %v1025 = vunpack.c.l.s4 1983009808
        %v1026 = vunpack.c.0.s8 %v1025
        %v1027 = vlaneseq
        %v1028 = vshrl.u32 %v1027, 7
        %v1029 = vsub.s32 %v1026, %v1028
        %v1030 = vrot.slane %v1016, %v1029
        %v1031 = vcombine.low %v1007, %v1023
        %v1032 = vcombine.high %v1007, %v1023
        %v1034 = vunpack.c.l.s4 1934713408
        %v1035 = vunpack.c.0.s8 %v1034
        %v1036 = vlaneseq
        %v1037 = vshrl.u32 %v1036, 7
        %v1038 = vsub.s32 %v1035, %v1037
        %v1039 = vrot.slane %v1031, %v1038
        %v1041 = vunpack.c.l.s4 1934713408
        %v1042 = vunpack.c.0.s8 %v1041
        %v1043 = vlaneseq
        %v1044 = vshrl.u32 %v1043, 7
        %v1045 = vsub.s32 %v1042, %v1044
        %v1046 = vrot.slane %v1032, %v1045
        %v1047 = vcombine.low %v1014, %v1030
        %v1048 = vcombine.high %v1014, %v1030
        %v1050 = vunpack.c.l.s4 1934713408
        %v1051 = vunpack.c.0.s8 %v1050
        %v1052 = vlaneseq
        %v1053 = vshrl.u32 %v1052, 7
        %v1054 = vsub.s32 %v1051, %v1053
        %v1055 = vrot.slane %v1047, %v1054
        %v1057 = vunpack.c.l.s4 1934713408
        %v1058 = vunpack.c.0.s8 %v1057
        %v1059 = vlaneseq
        %v1060 = vshrl.u32 %v1059, 7
        %v1061 = vsub.s32 %v1058, %v1060
        %v1062 = vrot.slane %v1048, %v1061
        %v1063 = vcombine.high %v1039, 0.0
        %v1064 = vcombine.high %v1046, 0.0
        %v1065 = vcombine.high %v1055, 0.0
        %v1066 = vcombine.high %v1062, 0.0
        %1068 = vrot.lane.b32.xlu0 %v1063, 16
        %v1069 = vpop.permute.xlu0 %1068
        %1072 = vrot.lane.b32.xlu0 %v1046, 32
        %v1073 = vpop.permute.xlu0 %1072
        %1076 = vrot.lane.b32.xlu0 %v1064, 48
        %v1077 = vpop.permute.xlu0 %1076
        %1080 = vrot.lane.b32.xlu0 %v1055, 64
        %v1081 = vpop.permute.xlu0 %1080
        %1084 = vrot.lane.b32.xlu0 %v1065, 80
        %v1085 = vpop.permute.xlu0 %1084
        %1088 = vrot.lane.b32.xlu0 %v1062, 96
        %v1089 = vpop.permute.xlu0 %1088
        %1092 = vrot.lane.b32.xlu0 %v1066, 112
        %v1093 = vpop.permute.xlu0 %1092
        %v1095 = vsel %vm281, %v1039, %v1069
        %v1096 = vsel %vm283, %v1095, %v1073
        %v1097 = vsel %vm285, %v1096, %v1077
        %v1098 = vsel %vm287, %v1097, %v1081
        %v1099 = vsel %vm289, %v1098, %v1085
        %v1100 = vsel %vm291, %v1099, %v1089
        %v1101 = vsel %vm293, %v1100, %v1093
        %1102 = vrot.lane.b32.xlu0 %v761, 125
        %v1103 = vpop.permute.xlu0 %1102
        %1104 = vrot.lane.b32.xlu0 %v762, 125
        %v1105 = vpop.permute.xlu0 %1104
        %1106 = vrot.lane.b32.xlu0 %v763, 125
        %v1107 = vpop.permute.xlu0 %1106
        %1108 = vrot.lane.b32.xlu0 %v764, 125
        %v1109 = vpop.permute.xlu0 %1108
        %v1114 = vcombine.low %v1103, %v1107
        %v1115 = vcombine.high %v1103, %v1107
        %v1117 = vunpack.c.l.s4 1983009808
        %v1118 = vunpack.c.0.s8 %v1117
        %v1119 = vlaneseq
        %v1120 = vshrl.u32 %v1119, 7
        %v1121 = vsub.s32 %v1118, %v1120
        %v1122 = vrot.slane %v1114, %v1121
        %v1124 = vunpack.c.l.s4 1983009808
        %v1125 = vunpack.c.0.s8 %v1124
        %v1126 = vlaneseq
        %v1127 = vshrl.u32 %v1126, 7
        %v1128 = vsub.s32 %v1125, %v1127
        %v1129 = vrot.slane %v1115, %v1128
        %v1130 = vcombine.low %v1105, %v1109
        %v1131 = vcombine.high %v1105, %v1109
        %v1133 = vunpack.c.l.s4 1983009808
        %v1134 = vunpack.c.0.s8 %v1133
        %v1135 = vlaneseq
        %v1136 = vshrl.u32 %v1135, 7
        %v1137 = vsub.s32 %v1134, %v1136
        %v1138 = vrot.slane %v1130, %v1137
        %v1140 = vunpack.c.l.s4 1983009808
        %v1141 = vunpack.c.0.s8 %v1140
        %v1142 = vlaneseq
        %v1143 = vshrl.u32 %v1142, 7
        %v1144 = vsub.s32 %v1141, %v1143
        %v1145 = vrot.slane %v1131, %v1144
        %v1146 = vcombine.low %v1122, %v1138
        %v1147 = vcombine.high %v1122, %v1138
        %v1149 = vunpack.c.l.s4 1934713408
        %v1150 = vunpack.c.0.s8 %v1149
        %v1151 = vlaneseq
        %v1152 = vshrl.u32 %v1151, 7
        %v1153 = vsub.s32 %v1150, %v1152
        %v1154 = vrot.slane %v1146, %v1153
        %v1156 = vunpack.c.l.s4 1934713408
        %v1157 = vunpack.c.0.s8 %v1156
        %v1158 = vlaneseq
        %v1159 = vshrl.u32 %v1158, 7
        %v1160 = vsub.s32 %v1157, %v1159
        %v1161 = vrot.slane %v1147, %v1160
        %v1162 = vcombine.low %v1129, %v1145
        %v1163 = vcombine.high %v1129, %v1145
        %v1165 = vunpack.c.l.s4 1934713408
        %v1166 = vunpack.c.0.s8 %v1165
        %v1167 = vlaneseq
        %v1168 = vshrl.u32 %v1167, 7
        %v1169 = vsub.s32 %v1166, %v1168
        %v1170 = vrot.slane %v1162, %v1169
        %v1172 = vunpack.c.l.s4 1934713408
        %v1173 = vunpack.c.0.s8 %v1172
        %v1174 = vlaneseq
        %v1175 = vshrl.u32 %v1174, 7
        %v1176 = vsub.s32 %v1173, %v1175
        %v1177 = vrot.slane %v1163, %v1176
        %v1178 = vcombine.high %v1154, 0.0
        %v1179 = vcombine.high %v1161, 0.0
        %v1180 = vcombine.high %v1170, 0.0
        %v1181 = vcombine.high %v1177, 0.0
        %1183 = vrot.lane.b32.xlu0 %v1178, 16
        %v1184 = vpop.permute.xlu0 %1183
        %1187 = vrot.lane.b32.xlu0 %v1161, 32
        %v1188 = vpop.permute.xlu0 %1187
        %1191 = vrot.lane.b32.xlu0 %v1179, 48
        %v1192 = vpop.permute.xlu0 %1191
        %1195 = vrot.lane.b32.xlu0 %v1170, 64
        %v1196 = vpop.permute.xlu0 %1195
        %1199 = vrot.lane.b32.xlu0 %v1180, 80
        %v1200 = vpop.permute.xlu0 %1199
        %1203 = vrot.lane.b32.xlu0 %v1177, 96
        %v1204 = vpop.permute.xlu0 %1203
        %1207 = vrot.lane.b32.xlu0 %v1181, 112
        %v1208 = vpop.permute.xlu0 %1207
        %v1210 = vsel %vm281, %v1154, %v1184
        %v1211 = vsel %vm283, %v1210, %v1188
        %v1212 = vsel %vm285, %v1211, %v1192
        %v1213 = vsel %vm287, %v1212, %v1196
        %v1214 = vsel %vm289, %v1213, %v1200
        %v1215 = vsel %vm291, %v1214, %v1204
        %v1216 = vsel %vm293, %v1215, %v1208
        %1217 = vrot.lane.b32.xlu0 %v761, 124
        %v1218 = vpop.permute.xlu0 %1217
        %1219 = vrot.lane.b32.xlu0 %v762, 124
        %v1220 = vpop.permute.xlu0 %1219
        %1221 = vrot.lane.b32.xlu0 %v763, 124
        %v1222 = vpop.permute.xlu0 %1221
        %1223 = vrot.lane.b32.xlu0 %v764, 124
        %v1224 = vpop.permute.xlu0 %1223
        %v1229 = vcombine.low %v1218, %v1222
        %v1230 = vcombine.high %v1218, %v1222
        %v1232 = vunpack.c.l.s4 1983009808
        %v1233 = vunpack.c.0.s8 %v1232
        %v1234 = vlaneseq
        %v1235 = vshrl.u32 %v1234, 7
        %v1236 = vsub.s32 %v1233, %v1235
        %v1237 = vrot.slane %v1229, %v1236
        %v1239 = vunpack.c.l.s4 1983009808
        %v1240 = vunpack.c.0.s8 %v1239
        %v1241 = vlaneseq
        %v1242 = vshrl.u32 %v1241, 7
        %v1243 = vsub.s32 %v1240, %v1242
        %v1244 = vrot.slane %v1230, %v1243
        %v1245 = vcombine.low %v1220, %v1224
        %v1246 = vcombine.high %v1220, %v1224
        %v1248 = vunpack.c.l.s4 1983009808
        %v1249 = vunpack.c.0.s8 %v1248
        %v1250 = vlaneseq
        %v1251 = vshrl.u32 %v1250, 7
        %v1252 = vsub.s32 %v1249, %v1251
        %v1253 = vrot.slane %v1245, %v1252
        %v1255 = vunpack.c.l.s4 1983009808
        %v1256 = vunpack.c.0.s8 %v1255
        %v1257 = vlaneseq
        %v1258 = vshrl.u32 %v1257, 7
        %v1259 = vsub.s32 %v1256, %v1258
        %v1260 = vrot.slane %v1246, %v1259
        %v1261 = vcombine.low %v1237, %v1253
        %v1262 = vcombine.high %v1237, %v1253
        %v1264 = vunpack.c.l.s4 1934713408
        %v1265 = vunpack.c.0.s8 %v1264
        %v1266 = vlaneseq
        %v1267 = vshrl.u32 %v1266, 7
        %v1268 = vsub.s32 %v1265, %v1267
        %v1269 = vrot.slane %v1261, %v1268
        %v1271 = vunpack.c.l.s4 1934713408
        %v1272 = vunpack.c.0.s8 %v1271
        %v1273 = vlaneseq
        %v1274 = vshrl.u32 %v1273, 7
        %v1275 = vsub.s32 %v1272, %v1274
        %v1276 = vrot.slane %v1262, %v1275
        %v1277 = vcombine.low %v1244, %v1260
        %v1278 = vcombine.high %v1244, %v1260
        %v1280 = vunpack.c.l.s4 1934713408
        %v1281 = vunpack.c.0.s8 %v1280
        %v1282 = vlaneseq
        %v1283 = vshrl.u32 %v1282, 7
        %v1284 = vsub.s32 %v1281, %v1283
        %v1285 = vrot.slane %v1277, %v1284
        %v1287 = vunpack.c.l.s4 1934713408
        %v1288 = vunpack.c.0.s8 %v1287
        %v1289 = vlaneseq
        %v1290 = vshrl.u32 %v1289, 7
        %v1291 = vsub.s32 %v1288, %v1290
        %v1292 = vrot.slane %v1278, %v1291
        %v1293 = vcombine.high %v1269, 0.0
        %v1294 = vcombine.high %v1276, 0.0
        %v1295 = vcombine.high %v1285, 0.0
        %v1296 = vcombine.high %v1292, 0.0
        %1298 = vrot.lane.b32.xlu0 %v1293, 16
        %v1299 = vpop.permute.xlu0 %1298
        %1302 = vrot.lane.b32.xlu0 %v1276, 32
        %v1303 = vpop.permute.xlu0 %1302
        %1306 = vrot.lane.b32.xlu0 %v1294, 48
        %v1307 = vpop.permute.xlu0 %1306
        %1310 = vrot.lane.b32.xlu0 %v1285, 64
        %v1311 = vpop.permute.xlu0 %1310
        %1314 = vrot.lane.b32.xlu0 %v1295, 80
        %v1315 = vpop.permute.xlu0 %1314
        %1318 = vrot.lane.b32.xlu0 %v1292, 96
        %v1319 = vpop.permute.xlu0 %1318
        %1322 = vrot.lane.b32.xlu0 %v1296, 112
        %v1323 = vpop.permute.xlu0 %1322
        %v1325 = vsel %vm281, %v1269, %v1299
        %v1326 = vsel %vm283, %v1325, %v1303
        %v1327 = vsel %vm285, %v1326, %v1307
        %v1328 = vsel %vm287, %v1327, %v1311
        %v1329 = vsel %vm289, %v1328, %v1315
        %v1330 = vsel %vm291, %v1329, %v1319
        %v1331 = vsel %vm293, %v1330, %v1323
        %s1332 = sadd.s32 %s179, 2
        %s1333 = scalar_lea.vmem %s178, %s1332
        %v1334 = vld [vmem:[%s1333] sm:$0xff]
        %v1335 = vld [vmem:[%s1333 + $0x18] sm:$0xff]
        %v1336 = vld [vmem:[%s1333 + $0x30] sm:$0xff]
        %v1337 = vld [vmem:[%s1333 + $0x48] sm:$0xff]
        %v1338 = vcombine.low %v1334, %v1336
        %v1339 = vcombine.high %v1334, %v1336
        %v1341 = vunpack.c.l.s4 1983009808
        %v1342 = vunpack.c.0.s8 %v1341
        %v1343 = vlaneseq
        %v1344 = vshrl.u32 %v1343, 7
        %v1345 = vsub.s32 %v1342, %v1344
        %v1346 = vrot.slane %v1338, %v1345
        %v1348 = vunpack.c.l.s4 1983009808
        %v1349 = vunpack.c.0.s8 %v1348
        %v1350 = vlaneseq
        %v1351 = vshrl.u32 %v1350, 7
        %v1352 = vsub.s32 %v1349, %v1351
        %v1353 = vrot.slane %v1339, %v1352
        %v1354 = vcombine.low %v1335, %v1337
        %v1355 = vcombine.high %v1335, %v1337
        %v1357 = vunpack.c.l.s4 1983009808
        %v1358 = vunpack.c.0.s8 %v1357
        %v1359 = vlaneseq
        %v1360 = vshrl.u32 %v1359, 7
        %v1361 = vsub.s32 %v1358, %v1360
        %v1362 = vrot.slane %v1354, %v1361
        %v1364 = vunpack.c.l.s4 1983009808
        %v1365 = vunpack.c.0.s8 %v1364
        %v1366 = vlaneseq
        %v1367 = vshrl.u32 %v1366, 7
        %v1368 = vsub.s32 %v1365, %v1367
        %v1369 = vrot.slane %v1355, %v1368
        %v1370 = vcombine.low %v1346, %v1362
        %v1371 = vcombine.high %v1346, %v1362
        %v1373 = vunpack.c.l.s4 1934713408
        %v1374 = vunpack.c.0.s8 %v1373
        %v1375 = vlaneseq
        %v1376 = vshrl.u32 %v1375, 7
        %v1377 = vsub.s32 %v1374, %v1376
        %v1378 = vrot.slane %v1370, %v1377
        %v1380 = vunpack.c.l.s4 1934713408
        %v1381 = vunpack.c.0.s8 %v1380
        %v1382 = vlaneseq
        %v1383 = vshrl.u32 %v1382, 7
        %v1384 = vsub.s32 %v1381, %v1383
        %v1385 = vrot.slane %v1371, %v1384
        %v1386 = vcombine.low %v1353, %v1369
        %v1387 = vcombine.high %v1353, %v1369
        %v1389 = vunpack.c.l.s4 1934713408
        %v1390 = vunpack.c.0.s8 %v1389
        %v1391 = vlaneseq
        %v1392 = vshrl.u32 %v1391, 7
        %v1393 = vsub.s32 %v1390, %v1392
        %v1394 = vrot.slane %v1386, %v1393
        %v1396 = vunpack.c.l.s4 1934713408
        %v1397 = vunpack.c.0.s8 %v1396
        %v1398 = vlaneseq
        %v1399 = vshrl.u32 %v1398, 7
        %v1400 = vsub.s32 %v1397, %v1399
        %v1401 = vrot.slane %v1387, %v1400
        %v1402 = vcombine.high %v1378, 0.0
        %v1403 = vcombine.high %v1385, 0.0
        %v1404 = vcombine.high %v1394, 0.0
        %v1405 = vcombine.high %v1401, 0.0
        %1407 = vrot.lane.b32.xlu0 %v1402, 16
        %v1408 = vpop.permute.xlu0 %1407
        %1411 = vrot.lane.b32.xlu0 %v1385, 32
        %v1412 = vpop.permute.xlu0 %1411
        %1415 = vrot.lane.b32.xlu0 %v1403, 48
        %v1416 = vpop.permute.xlu0 %1415
        %1419 = vrot.lane.b32.xlu0 %v1394, 64
        %v1420 = vpop.permute.xlu0 %1419
        %1423 = vrot.lane.b32.xlu0 %v1404, 80
        %v1424 = vpop.permute.xlu0 %1423
        %1427 = vrot.lane.b32.xlu0 %v1401, 96
        %v1428 = vpop.permute.xlu0 %1427
        %1431 = vrot.lane.b32.xlu0 %v1405, 112
        %v1432 = vpop.permute.xlu0 %1431
        %v1434 = vsel %vm281, %v1378, %v1408
        %v1435 = vsel %vm283, %v1434, %v1412
        %v1436 = vsel %vm285, %v1435, %v1416
        %v1437 = vsel %vm287, %v1436, %v1420
        %v1438 = vsel %vm289, %v1437, %v1424
        %v1439 = vsel %vm291, %v1438, %v1428
        %v1440 = vsel %vm293, %v1439, %v1432
        %1445 = vrot.lane.b32.xlu0 %v1334, 127
        %v1446 = vpop.permute.xlu0 %1445
        %1447 = vrot.lane.b32.xlu0 %v1335, 127
        %v1448 = vpop.permute.xlu0 %1447
        %1449 = vrot.lane.b32.xlu0 %v1336, 127
        %v1450 = vpop.permute.xlu0 %1449
        %1451 = vrot.lane.b32.xlu0 %v1337, 127
        %v1452 = vpop.permute.xlu0 %1451
        %v1457 = vcombine.low %v1446, %v1450
        %v1458 = vcombine.high %v1446, %v1450
        %v1460 = vunpack.c.l.s4 1983009808
        %v1461 = vunpack.c.0.s8 %v1460
        %v1462 = vlaneseq
        %v1463 = vshrl.u32 %v1462, 7
        %v1464 = vsub.s32 %v1461, %v1463
        %v1465 = vrot.slane %v1457, %v1464
        %v1467 = vunpack.c.l.s4 1983009808
        %v1468 = vunpack.c.0.s8 %v1467
        %v1469 = vlaneseq
        %v1470 = vshrl.u32 %v1469, 7
        %v1471 = vsub.s32 %v1468, %v1470
        %v1472 = vrot.slane %v1458, %v1471
        %v1473 = vcombine.low %v1448, %v1452
        %v1474 = vcombine.high %v1448, %v1452
        %v1476 = vunpack.c.l.s4 1983009808
        %v1477 = vunpack.c.0.s8 %v1476
        %v1478 = vlaneseq
        %v1479 = vshrl.u32 %v1478, 7
        %v1480 = vsub.s32 %v1477, %v1479
        %v1481 = vrot.slane %v1473, %v1480
        %v1483 = vunpack.c.l.s4 1983009808
        %v1484 = vunpack.c.0.s8 %v1483
        %v1485 = vlaneseq
        %v1486 = vshrl.u32 %v1485, 7
        %v1487 = vsub.s32 %v1484, %v1486
        %v1488 = vrot.slane %v1474, %v1487
        %v1489 = vcombine.low %v1465, %v1481
        %v1490 = vcombine.high %v1465, %v1481
        %v1492 = vunpack.c.l.s4 1934713408
        %v1493 = vunpack.c.0.s8 %v1492
        %v1494 = vlaneseq
        %v1495 = vshrl.u32 %v1494, 7
        %v1496 = vsub.s32 %v1493, %v1495
        %v1497 = vrot.slane %v1489, %v1496
        %v1499 = vunpack.c.l.s4 1934713408
        %v1500 = vunpack.c.0.s8 %v1499
        %v1501 = vlaneseq
        %v1502 = vshrl.u32 %v1501, 7
        %v1503 = vsub.s32 %v1500, %v1502
        %v1504 = vrot.slane %v1490, %v1503
        %v1505 = vcombine.low %v1472, %v1488
        %v1506 = vcombine.high %v1472, %v1488
        %v1508 = vunpack.c.l.s4 1934713408
        %v1509 = vunpack.c.0.s8 %v1508
        %v1510 = vlaneseq
        %v1511 = vshrl.u32 %v1510, 7
        %v1512 = vsub.s32 %v1509, %v1511
        %v1513 = vrot.slane %v1505, %v1512
        %v1515 = vunpack.c.l.s4 1934713408
        %v1516 = vunpack.c.0.s8 %v1515
        %v1517 = vlaneseq
        %v1518 = vshrl.u32 %v1517, 7
        %v1519 = vsub.s32 %v1516, %v1518
        %v1520 = vrot.slane %v1506, %v1519
        %v1521 = vcombine.high %v1497, 0.0
        %v1522 = vcombine.high %v1504, 0.0
        %v1523 = vcombine.high %v1513, 0.0
        %v1524 = vcombine.high %v1520, 0.0
        %1526 = vrot.lane.b32.xlu0 %v1521, 16
        %v1527 = vpop.permute.xlu0 %1526
        %1530 = vrot.lane.b32.xlu0 %v1504, 32
        %v1531 = vpop.permute.xlu0 %1530
        %1534 = vrot.lane.b32.xlu0 %v1522, 48
        %v1535 = vpop.permute.xlu0 %1534
        %1538 = vrot.lane.b32.xlu0 %v1513, 64
        %v1539 = vpop.permute.xlu0 %1538
        %1542 = vrot.lane.b32.xlu0 %v1523, 80
        %v1543 = vpop.permute.xlu0 %1542
        %1546 = vrot.lane.b32.xlu0 %v1520, 96
        %v1547 = vpop.permute.xlu0 %1546
        %1550 = vrot.lane.b32.xlu0 %v1524, 112
        %v1551 = vpop.permute.xlu0 %1550
        %v1553 = vsel %vm281, %v1497, %v1527
        %v1554 = vsel %vm283, %v1553, %v1531
        %v1555 = vsel %vm285, %v1554, %v1535
        %v1556 = vsel %vm287, %v1555, %v1539
        %v1557 = vsel %vm289, %v1556, %v1543
        %v1558 = vsel %vm291, %v1557, %v1547
        %v1559 = vsel %vm293, %v1558, %v1551
        %1560 = vrot.lane.b32.xlu0 %v1334, 126
        %v1561 = vpop.permute.xlu0 %1560
        %1562 = vrot.lane.b32.xlu0 %v1335, 126
        %v1563 = vpop.permute.xlu0 %1562
        %1564 = vrot.lane.b32.xlu0 %v1336, 126
        %v1565 = vpop.permute.xlu0 %1564
        %1566 = vrot.lane.b32.xlu0 %v1337, 126
        %v1567 = vpop.permute.xlu0 %1566
        %v1572 = vcombine.low %v1561, %v1565
        %v1573 = vcombine.high %v1561, %v1565
        %v1575 = vunpack.c.l.s4 1983009808
        %v1576 = vunpack.c.0.s8 %v1575
        %v1577 = vlaneseq
        %v1578 = vshrl.u32 %v1577, 7
        %v1579 = vsub.s32 %v1576, %v1578
        %v1580 = vrot.slane %v1572, %v1579
        %v1582 = vunpack.c.l.s4 1983009808
        %v1583 = vunpack.c.0.s8 %v1582
        %v1584 = vlaneseq
        %v1585 = vshrl.u32 %v1584, 7
        %v1586 = vsub.s32 %v1583, %v1585
        %v1587 = vrot.slane %v1573, %v1586
        %v1588 = vcombine.low %v1563, %v1567
        %v1589 = vcombine.high %v1563, %v1567
        %v1591 = vunpack.c.l.s4 1983009808
        %v1592 = vunpack.c.0.s8 %v1591
        %v1593 = vlaneseq
        %v1594 = vshrl.u32 %v1593, 7
        %v1595 = vsub.s32 %v1592, %v1594
        %v1596 = vrot.slane %v1588, %v1595
        %v1598 = vunpack.c.l.s4 1983009808
        %v1599 = vunpack.c.0.s8 %v1598
        %v1600 = vlaneseq
        %v1601 = vshrl.u32 %v1600, 7
        %v1602 = vsub.s32 %v1599, %v1601
        %v1603 = vrot.slane %v1589, %v1602
        %v1604 = vcombine.low %v1580, %v1596
        %v1605 = vcombine.high %v1580, %v1596
        %v1607 = vunpack.c.l.s4 1934713408
        %v1608 = vunpack.c.0.s8 %v1607
        %v1609 = vlaneseq
        %v1610 = vshrl.u32 %v1609, 7
        %v1611 = vsub.s32 %v1608, %v1610
        %v1612 = vrot.slane %v1604, %v1611
        %v1614 = vunpack.c.l.s4 1934713408
        %v1615 = vunpack.c.0.s8 %v1614
        %v1616 = vlaneseq
        %v1617 = vshrl.u32 %v1616, 7
        %v1618 = vsub.s32 %v1615, %v1617
        %v1619 = vrot.slane %v1605, %v1618
        %v1620 = vcombine.low %v1587, %v1603
        %v1621 = vcombine.high %v1587, %v1603
        %v1623 = vunpack.c.l.s4 1934713408
        %v1624 = vunpack.c.0.s8 %v1623
        %v1625 = vlaneseq
        %v1626 = vshrl.u32 %v1625, 7
        %v1627 = vsub.s32 %v1624, %v1626
        %v1628 = vrot.slane %v1620, %v1627
        %v1630 = vunpack.c.l.s4 1934713408
        %v1631 = vunpack.c.0.s8 %v1630
        %v1632 = vlaneseq
        %v1633 = vshrl.u32 %v1632, 7
        %v1634 = vsub.s32 %v1631, %v1633
        %v1635 = vrot.slane %v1621, %v1634
        %v1636 = vcombine.high %v1612, 0.0
        %v1637 = vcombine.high %v1619, 0.0
        %v1638 = vcombine.high %v1628, 0.0
        %v1639 = vcombine.high %v1635, 0.0
        %1641 = vrot.lane.b32.xlu0 %v1636, 16
        %v1642 = vpop.permute.xlu0 %1641
        %1645 = vrot.lane.b32.xlu0 %v1619, 32
        %v1646 = vpop.permute.xlu0 %1645
        %1649 = vrot.lane.b32.xlu0 %v1637, 48
        %v1650 = vpop.permute.xlu0 %1649
        %1653 = vrot.lane.b32.xlu0 %v1628, 64
        %v1654 = vpop.permute.xlu0 %1653
        %1657 = vrot.lane.b32.xlu0 %v1638, 80
        %v1658 = vpop.permute.xlu0 %1657
        %1661 = vrot.lane.b32.xlu0 %v1635, 96
        %v1662 = vpop.permute.xlu0 %1661
        %1665 = vrot.lane.b32.xlu0 %v1639, 112
        %v1666 = vpop.permute.xlu0 %1665
        %v1668 = vsel %vm281, %v1612, %v1642
        %v1669 = vsel %vm283, %v1668, %v1646
        %v1670 = vsel %vm285, %v1669, %v1650
        %v1671 = vsel %vm287, %v1670, %v1654
        %v1672 = vsel %vm289, %v1671, %v1658
        %v1673 = vsel %vm291, %v1672, %v1662
        %v1674 = vsel %vm293, %v1673, %v1666
        %1675 = vrot.lane.b32.xlu0 %v1334, 125
        %v1676 = vpop.permute.xlu0 %1675
        %1677 = vrot.lane.b32.xlu0 %v1335, 125
        %v1678 = vpop.permute.xlu0 %1677
        %1679 = vrot.lane.b32.xlu0 %v1336, 125
        %v1680 = vpop.permute.xlu0 %1679
        %1681 = vrot.lane.b32.xlu0 %v1337, 125
        %v1682 = vpop.permute.xlu0 %1681
        %v1687 = vcombine.low %v1676, %v1680
        %v1688 = vcombine.high %v1676, %v1680
        %v1690 = vunpack.c.l.s4 1983009808
        %v1691 = vunpack.c.0.s8 %v1690
        %v1692 = vlaneseq
        %v1693 = vshrl.u32 %v1692, 7
        %v1694 = vsub.s32 %v1691, %v1693
        %v1695 = vrot.slane %v1687, %v1694
        %v1697 = vunpack.c.l.s4 1983009808
        %v1698 = vunpack.c.0.s8 %v1697
        %v1699 = vlaneseq
        %v1700 = vshrl.u32 %v1699, 7
        %v1701 = vsub.s32 %v1698, %v1700
        %v1702 = vrot.slane %v1688, %v1701
        %v1703 = vcombine.low %v1678, %v1682
        %v1704 = vcombine.high %v1678, %v1682
        %v1706 = vunpack.c.l.s4 1983009808
        %v1707 = vunpack.c.0.s8 %v1706
        %v1708 = vlaneseq
        %v1709 = vshrl.u32 %v1708, 7
        %v1710 = vsub.s32 %v1707, %v1709
        %v1711 = vrot.slane %v1703, %v1710
        %v1713 = vunpack.c.l.s4 1983009808
        %v1714 = vunpack.c.0.s8 %v1713
        %v1715 = vlaneseq
        %v1716 = vshrl.u32 %v1715, 7
        %v1717 = vsub.s32 %v1714, %v1716
        %v1718 = vrot.slane %v1704, %v1717
        %v1719 = vcombine.low %v1695, %v1711
        %v1720 = vcombine.high %v1695, %v1711
        %v1722 = vunpack.c.l.s4 1934713408
        %v1723 = vunpack.c.0.s8 %v1722
        %v1724 = vlaneseq
        %v1725 = vshrl.u32 %v1724, 7
        %v1726 = vsub.s32 %v1723, %v1725
        %v1727 = vrot.slane %v1719, %v1726
        %v1729 = vunpack.c.l.s4 1934713408
        %v1730 = vunpack.c.0.s8 %v1729
        %v1731 = vlaneseq
        %v1732 = vshrl.u32 %v1731, 7
        %v1733 = vsub.s32 %v1730, %v1732
        %v1734 = vrot.slane %v1720, %v1733
        %v1735 = vcombine.low %v1702, %v1718
        %v1736 = vcombine.high %v1702, %v1718
        %v1738 = vunpack.c.l.s4 1934713408
        %v1739 = vunpack.c.0.s8 %v1738
        %v1740 = vlaneseq
        %v1741 = vshrl.u32 %v1740, 7
        %v1742 = vsub.s32 %v1739, %v1741
        %v1743 = vrot.slane %v1735, %v1742
        %v1745 = vunpack.c.l.s4 1934713408
        %v1746 = vunpack.c.0.s8 %v1745
        %v1747 = vlaneseq
        %v1748 = vshrl.u32 %v1747, 7
        %v1749 = vsub.s32 %v1746, %v1748
        %v1750 = vrot.slane %v1736, %v1749
        %v1751 = vcombine.high %v1727, 0.0
        %v1752 = vcombine.high %v1734, 0.0
        %v1753 = vcombine.high %v1743, 0.0
        %v1754 = vcombine.high %v1750, 0.0
        %1756 = vrot.lane.b32.xlu0 %v1751, 16
        %v1757 = vpop.permute.xlu0 %1756
        %1760 = vrot.lane.b32.xlu0 %v1734, 32
        %v1761 = vpop.permute.xlu0 %1760
        %1764 = vrot.lane.b32.xlu0 %v1752, 48
        %v1765 = vpop.permute.xlu0 %1764
        %1768 = vrot.lane.b32.xlu0 %v1743, 64
        %v1769 = vpop.permute.xlu0 %1768
        %1772 = vrot.lane.b32.xlu0 %v1753, 80
        %v1773 = vpop.permute.xlu0 %1772
        %1776 = vrot.lane.b32.xlu0 %v1750, 96
        %v1777 = vpop.permute.xlu0 %1776
        %1780 = vrot.lane.b32.xlu0 %v1754, 112
        %v1781 = vpop.permute.xlu0 %1780
        %v1783 = vsel %vm281, %v1727, %v1757
        %v1784 = vsel %vm283, %v1783, %v1761
        %v1785 = vsel %vm285, %v1784, %v1765
        %v1786 = vsel %vm287, %v1785, %v1769
        %v1787 = vsel %vm289, %v1786, %v1773
        %v1788 = vsel %vm291, %v1787, %v1777
        %v1789 = vsel %vm293, %v1788, %v1781
        %1790 = vrot.lane.b32.xlu0 %v1334, 124
        %v1791 = vpop.permute.xlu0 %1790
        %1792 = vrot.lane.b32.xlu0 %v1335, 124
        %v1793 = vpop.permute.xlu0 %1792
        %1794 = vrot.lane.b32.xlu0 %v1336, 124
        %v1795 = vpop.permute.xlu0 %1794
        %1796 = vrot.lane.b32.xlu0 %v1337, 124
        %v1797 = vpop.permute.xlu0 %1796
        %v1802 = vcombine.low %v1791, %v1795
        %v1803 = vcombine.high %v1791, %v1795
        %v1805 = vunpack.c.l.s4 1983009808
        %v1806 = vunpack.c.0.s8 %v1805
        %v1807 = vlaneseq
        %v1808 = vshrl.u32 %v1807, 7
        %v1809 = vsub.s32 %v1806, %v1808
        %v1810 = vrot.slane %v1802, %v1809
        %v1812 = vunpack.c.l.s4 1983009808
        %v1813 = vunpack.c.0.s8 %v1812
        %v1814 = vlaneseq
        %v1815 = vshrl.u32 %v1814, 7
        %v1816 = vsub.s32 %v1813, %v1815
        %v1817 = vrot.slane %v1803, %v1816
        %v1818 = vcombine.low %v1793, %v1797
        %v1819 = vcombine.high %v1793, %v1797
        %v1821 = vunpack.c.l.s4 1983009808
        %v1822 = vunpack.c.0.s8 %v1821
        %v1823 = vlaneseq
        %v1824 = vshrl.u32 %v1823, 7
        %v1825 = vsub.s32 %v1822, %v1824
        %v1826 = vrot.slane %v1818, %v1825
        %v1828 = vunpack.c.l.s4 1983009808
        %v1829 = vunpack.c.0.s8 %v1828
        %v1830 = vlaneseq
        %v1831 = vshrl.u32 %v1830, 7
        %v1832 = vsub.s32 %v1829, %v1831
        %v1833 = vrot.slane %v1819, %v1832
        %v1834 = vcombine.low %v1810, %v1826
        %v1835 = vcombine.high %v1810, %v1826
        %v1837 = vunpack.c.l.s4 1934713408
        %v1838 = vunpack.c.0.s8 %v1837
        %v1839 = vlaneseq
        %v1840 = vshrl.u32 %v1839, 7
        %v1841 = vsub.s32 %v1838, %v1840
        %v1842 = vrot.slane %v1834, %v1841
        %v1844 = vunpack.c.l.s4 1934713408
        %v1845 = vunpack.c.0.s8 %v1844
        %v1846 = vlaneseq
        %v1847 = vshrl.u32 %v1846, 7
        %v1848 = vsub.s32 %v1845, %v1847
        %v1849 = vrot.slane %v1835, %v1848
        %v1850 = vcombine.low %v1817, %v1833
        %v1851 = vcombine.high %v1817, %v1833
        %v1853 = vunpack.c.l.s4 1934713408
        %v1854 = vunpack.c.0.s8 %v1853
        %v1855 = vlaneseq
        %v1856 = vshrl.u32 %v1855, 7
        %v1857 = vsub.s32 %v1854, %v1856
        %v1858 = vrot.slane %v1850, %v1857
        %v1860 = vunpack.c.l.s4 1934713408
        %v1861 = vunpack.c.0.s8 %v1860
        %v1862 = vlaneseq
        %v1863 = vshrl.u32 %v1862, 7
        %v1864 = vsub.s32 %v1861, %v1863
        %v1865 = vrot.slane %v1851, %v1864
        %v1866 = vcombine.high %v1842, 0.0
        %v1867 = vcombine.high %v1849, 0.0
        %v1868 = vcombine.high %v1858, 0.0
        %v1869 = vcombine.high %v1865, 0.0
        %1871 = vrot.lane.b32.xlu0 %v1866, 16
        %v1872 = vpop.permute.xlu0 %1871
        %1875 = vrot.lane.b32.xlu0 %v1849, 32
        %v1876 = vpop.permute.xlu0 %1875
        %1879 = vrot.lane.b32.xlu0 %v1867, 48
        %v1880 = vpop.permute.xlu0 %1879
        %1883 = vrot.lane.b32.xlu0 %v1858, 64
        %v1884 = vpop.permute.xlu0 %1883
        %1887 = vrot.lane.b32.xlu0 %v1868, 80
        %v1888 = vpop.permute.xlu0 %1887
        %1891 = vrot.lane.b32.xlu0 %v1865, 96
        %v1892 = vpop.permute.xlu0 %1891
        %1895 = vrot.lane.b32.xlu0 %v1869, 112
        %v1896 = vpop.permute.xlu0 %1895
        %v1898 = vsel %vm281, %v1842, %v1872
        %v1899 = vsel %vm283, %v1898, %v1876
        %v1900 = vsel %vm285, %v1899, %v1880
        %v1901 = vsel %vm287, %v1900, %v1884
        %v1902 = vsel %vm289, %v1901, %v1888
        %v1903 = vsel %vm291, %v1902, %v1892
        %v1904 = vsel %vm293, %v1903, %v1896
        %s1905 = sadd.s32 %s179, 3
        %s1906 = scalar_lea.vmem %s178, %s1905
        %v1907 = vld [vmem:[%s1906] sm:$0xff]
        %v1908 = vld [vmem:[%s1906 + $0x18] sm:$0xff]
        %v1909 = vld [vmem:[%s1906 + $0x30] sm:$0xff]
        %v1910 = vld [vmem:[%s1906 + $0x48] sm:$0xff]
        %v1911 = vcombine.low %v1907, %v1909
        %v1912 = vcombine.high %v1907, %v1909
        %v1914 = vunpack.c.l.s4 1983009808
        %v1915 = vunpack.c.0.s8 %v1914
        %v1916 = vlaneseq
        %v1917 = vshrl.u32 %v1916, 7
        %v1918 = vsub.s32 %v1915, %v1917
        %v1919 = vrot.slane %v1911, %v1918
        %v1921 = vunpack.c.l.s4 1983009808
        %v1922 = vunpack.c.0.s8 %v1921
        %v1923 = vlaneseq
        %v1924 = vshrl.u32 %v1923, 7
        %v1925 = vsub.s32 %v1922, %v1924
        %v1926 = vrot.slane %v1912, %v1925
        %v1927 = vcombine.low %v1908, %v1910
        %v1928 = vcombine.high %v1908, %v1910
        %v1930 = vunpack.c.l.s4 1983009808
        %v1931 = vunpack.c.0.s8 %v1930
        %v1932 = vlaneseq
        %v1933 = vshrl.u32 %v1932, 7
        %v1934 = vsub.s32 %v1931, %v1933
        %v1935 = vrot.slane %v1927, %v1934
        %v1937 = vunpack.c.l.s4 1983009808
        %v1938 = vunpack.c.0.s8 %v1937
        %v1939 = vlaneseq
        %v1940 = vshrl.u32 %v1939, 7
        %v1941 = vsub.s32 %v1938, %v1940
        %v1942 = vrot.slane %v1928, %v1941
        %v1943 = vcombine.low %v1919, %v1935
        %v1944 = vcombine.high %v1919, %v1935
        %v1946 = vunpack.c.l.s4 1934713408
        %v1947 = vunpack.c.0.s8 %v1946
        %v1948 = vlaneseq
        %v1949 = vshrl.u32 %v1948, 7
        %v1950 = vsub.s32 %v1947, %v1949
        %v1951 = vrot.slane %v1943, %v1950
        %v1953 = vunpack.c.l.s4 1934713408
        %v1954 = vunpack.c.0.s8 %v1953
        %v1955 = vlaneseq
        %v1956 = vshrl.u32 %v1955, 7
        %v1957 = vsub.s32 %v1954, %v1956
        %v1958 = vrot.slane %v1944, %v1957
        %v1959 = vcombine.low %v1926, %v1942
        %v1960 = vcombine.high %v1926, %v1942
        %v1962 = vunpack.c.l.s4 1934713408
        %v1963 = vunpack.c.0.s8 %v1962
        %v1964 = vlaneseq
        %v1965 = vshrl.u32 %v1964, 7
        %v1966 = vsub.s32 %v1963, %v1965
        %v1967 = vrot.slane %v1959, %v1966
        %v1969 = vunpack.c.l.s4 1934713408
        %v1970 = vunpack.c.0.s8 %v1969
        %v1971 = vlaneseq
        %v1972 = vshrl.u32 %v1971, 7
        %v1973 = vsub.s32 %v1970, %v1972
        %v1974 = vrot.slane %v1960, %v1973
        %v1975 = vcombine.high %v1951, 0.0
        %v1976 = vcombine.high %v1958, 0.0
        %v1977 = vcombine.high %v1967, 0.0
        %v1978 = vcombine.high %v1974, 0.0
        %1980 = vrot.lane.b32.xlu0 %v1975, 16
        %v1981 = vpop.permute.xlu0 %1980
        %1984 = vrot.lane.b32.xlu0 %v1958, 32
        %v1985 = vpop.permute.xlu0 %1984
        %1988 = vrot.lane.b32.xlu0 %v1976, 48
        %v1989 = vpop.permute.xlu0 %1988
        %1992 = vrot.lane.b32.xlu0 %v1967, 64
        %v1993 = vpop.permute.xlu0 %1992
        %1996 = vrot.lane.b32.xlu0 %v1977, 80
        %v1997 = vpop.permute.xlu0 %1996
        %2000 = vrot.lane.b32.xlu0 %v1974, 96
        %v2001 = vpop.permute.xlu0 %2000
        %2004 = vrot.lane.b32.xlu0 %v1978, 112
        %v2005 = vpop.permute.xlu0 %2004
        %v2007 = vsel %vm281, %v1951, %v1981
        %v2008 = vsel %vm283, %v2007, %v1985
        %v2009 = vsel %vm285, %v2008, %v1989
        %v2010 = vsel %vm287, %v2009, %v1993
        %v2011 = vsel %vm289, %v2010, %v1997
        %v2012 = vsel %vm291, %v2011, %v2001
        %v2013 = vsel %vm293, %v2012, %v2005
        %2018 = vrot.lane.b32.xlu0 %v1907, 127
        %v2019 = vpop.permute.xlu0 %2018
        %2020 = vrot.lane.b32.xlu0 %v1908, 127
        %v2021 = vpop.permute.xlu0 %2020
        %2022 = vrot.lane.b32.xlu0 %v1909, 127
        %v2023 = vpop.permute.xlu0 %2022
        %2024 = vrot.lane.b32.xlu0 %v1910, 127
        %v2025 = vpop.permute.xlu0 %2024
        %v2030 = vcombine.low %v2019, %v2023
        %v2031 = vcombine.high %v2019, %v2023
        %v2033 = vunpack.c.l.s4 1983009808
        %v2034 = vunpack.c.0.s8 %v2033
        %v2035 = vlaneseq
        %v2036 = vshrl.u32 %v2035, 7
        %v2037 = vsub.s32 %v2034, %v2036
        %v2038 = vrot.slane %v2030, %v2037
        %v2040 = vunpack.c.l.s4 1983009808
        %v2041 = vunpack.c.0.s8 %v2040
        %v2042 = vlaneseq
        %v2043 = vshrl.u32 %v2042, 7
        %v2044 = vsub.s32 %v2041, %v2043
        %v2045 = vrot.slane %v2031, %v2044
        %v2046 = vcombine.low %v2021, %v2025
        %v2047 = vcombine.high %v2021, %v2025
        %v2049 = vunpack.c.l.s4 1983009808
        %v2050 = vunpack.c.0.s8 %v2049
        %v2051 = vlaneseq
        %v2052 = vshrl.u32 %v2051, 7
        %v2053 = vsub.s32 %v2050, %v2052
        %v2054 = vrot.slane %v2046, %v2053
        %v2056 = vunpack.c.l.s4 1983009808
        %v2057 = vunpack.c.0.s8 %v2056
        %v2058 = vlaneseq
        %v2059 = vshrl.u32 %v2058, 7
        %v2060 = vsub.s32 %v2057, %v2059
        %v2061 = vrot.slane %v2047, %v2060
        %v2062 = vcombine.low %v2038, %v2054
        %v2063 = vcombine.high %v2038, %v2054
        %v2065 = vunpack.c.l.s4 1934713408
        %v2066 = vunpack.c.0.s8 %v2065
        %v2067 = vlaneseq
        %v2068 = vshrl.u32 %v2067, 7
        %v2069 = vsub.s32 %v2066, %v2068
        %v2070 = vrot.slane %v2062, %v2069
        %v2072 = vunpack.c.l.s4 1934713408
        %v2073 = vunpack.c.0.s8 %v2072
        %v2074 = vlaneseq
        %v2075 = vshrl.u32 %v2074, 7
        %v2076 = vsub.s32 %v2073, %v2075
        %v2077 = vrot.slane %v2063, %v2076
        %v2078 = vcombine.low %v2045, %v2061
        %v2079 = vcombine.high %v2045, %v2061
        %v2081 = vunpack.c.l.s4 1934713408
        %v2082 = vunpack.c.0.s8 %v2081
        %v2083 = vlaneseq
        %v2084 = vshrl.u32 %v2083, 7
        %v2085 = vsub.s32 %v2082, %v2084
        %v2086 = vrot.slane %v2078, %v2085
        %v2088 = vunpack.c.l.s4 1934713408
        %v2089 = vunpack.c.0.s8 %v2088
        %v2090 = vlaneseq
        %v2091 = vshrl.u32 %v2090, 7
        %v2092 = vsub.s32 %v2089, %v2091
        %v2093 = vrot.slane %v2079, %v2092
        %v2094 = vcombine.high %v2070, 0.0
        %v2095 = vcombine.high %v2077, 0.0
        %v2096 = vcombine.high %v2086, 0.0
        %v2097 = vcombine.high %v2093, 0.0
        %2099 = vrot.lane.b32.xlu0 %v2094, 16
        %v2100 = vpop.permute.xlu0 %2099
        %2103 = vrot.lane.b32.xlu0 %v2077, 32
        %v2104 = vpop.permute.xlu0 %2103
        %2107 = vrot.lane.b32.xlu0 %v2095, 48
        %v2108 = vpop.permute.xlu0 %2107
        %2111 = vrot.lane.b32.xlu0 %v2086, 64
        %v2112 = vpop.permute.xlu0 %2111
        %2115 = vrot.lane.b32.xlu0 %v2096, 80
        %v2116 = vpop.permute.xlu0 %2115
        %2119 = vrot.lane.b32.xlu0 %v2093, 96
        %v2120 = vpop.permute.xlu0 %2119
        %2123 = vrot.lane.b32.xlu0 %v2097, 112
        %v2124 = vpop.permute.xlu0 %2123
        %v2126 = vsel %vm281, %v2070, %v2100
        %v2127 = vsel %vm283, %v2126, %v2104
        %v2128 = vsel %vm285, %v2127, %v2108
        %v2129 = vsel %vm287, %v2128, %v2112
        %v2130 = vsel %vm289, %v2129, %v2116
        %v2131 = vsel %vm291, %v2130, %v2120
        %v2132 = vsel %vm293, %v2131, %v2124
        %2133 = vrot.lane.b32.xlu0 %v1907, 126
        %v2134 = vpop.permute.xlu0 %2133
        %2135 = vrot.lane.b32.xlu0 %v1908, 126
        %v2136 = vpop.permute.xlu0 %2135
        %2137 = vrot.lane.b32.xlu0 %v1909, 126
        %v2138 = vpop.permute.xlu0 %2137
        %2139 = vrot.lane.b32.xlu0 %v1910, 126
        %v2140 = vpop.permute.xlu0 %2139
        %v2145 = vcombine.low %v2134, %v2138
        %v2146 = vcombine.high %v2134, %v2138
        %v2148 = vunpack.c.l.s4 1983009808
        %v2149 = vunpack.c.0.s8 %v2148
        %v2150 = vlaneseq
        %v2151 = vshrl.u32 %v2150, 7
        %v2152 = vsub.s32 %v2149, %v2151
        %v2153 = vrot.slane %v2145, %v2152
        %v2155 = vunpack.c.l.s4 1983009808
        %v2156 = vunpack.c.0.s8 %v2155
        %v2157 = vlaneseq
        %v2158 = vshrl.u32 %v2157, 7
        %v2159 = vsub.s32 %v2156, %v2158
        %v2160 = vrot.slane %v2146, %v2159
        %v2161 = vcombine.low %v2136, %v2140
        %v2162 = vcombine.high %v2136, %v2140
        %v2164 = vunpack.c.l.s4 1983009808
        %v2165 = vunpack.c.0.s8 %v2164
        %v2166 = vlaneseq
        %v2167 = vshrl.u32 %v2166, 7
        %v2168 = vsub.s32 %v2165, %v2167
        %v2169 = vrot.slane %v2161, %v2168
        %v2171 = vunpack.c.l.s4 1983009808
        %v2172 = vunpack.c.0.s8 %v2171
        %v2173 = vlaneseq
        %v2174 = vshrl.u32 %v2173, 7
        %v2175 = vsub.s32 %v2172, %v2174
        %v2176 = vrot.slane %v2162, %v2175
        %v2177 = vcombine.low %v2153, %v2169
        %v2178 = vcombine.high %v2153, %v2169
        %v2180 = vunpack.c.l.s4 1934713408
        %v2181 = vunpack.c.0.s8 %v2180
        %v2182 = vlaneseq
        %v2183 = vshrl.u32 %v2182, 7
        %v2184 = vsub.s32 %v2181, %v2183
        %v2185 = vrot.slane %v2177, %v2184
        %v2187 = vunpack.c.l.s4 1934713408
        %v2188 = vunpack.c.0.s8 %v2187
        %v2189 = vlaneseq
        %v2190 = vshrl.u32 %v2189, 7
        %v2191 = vsub.s32 %v2188, %v2190
        %v2192 = vrot.slane %v2178, %v2191
        %v2193 = vcombine.low %v2160, %v2176
        %v2194 = vcombine.high %v2160, %v2176
        %v2196 = vunpack.c.l.s4 1934713408
        %v2197 = vunpack.c.0.s8 %v2196
        %v2198 = vlaneseq
        %v2199 = vshrl.u32 %v2198, 7
        %v2200 = vsub.s32 %v2197, %v2199
        %v2201 = vrot.slane %v2193, %v2200
        %v2203 = vunpack.c.l.s4 1934713408
        %v2204 = vunpack.c.0.s8 %v2203
        %v2205 = vlaneseq
        %v2206 = vshrl.u32 %v2205, 7
        %v2207 = vsub.s32 %v2204, %v2206
        %v2208 = vrot.slane %v2194, %v2207
        %v2209 = vcombine.high %v2185, 0.0
        %v2210 = vcombine.high %v2192, 0.0
        %v2211 = vcombine.high %v2201, 0.0
        %v2212 = vcombine.high %v2208, 0.0
        %2214 = vrot.lane.b32.xlu0 %v2209, 16
        %v2215 = vpop.permute.xlu0 %2214
        %2218 = vrot.lane.b32.xlu0 %v2192, 32
        %v2219 = vpop.permute.xlu0 %2218
        %2222 = vrot.lane.b32.xlu0 %v2210, 48
        %v2223 = vpop.permute.xlu0 %2222
        %2226 = vrot.lane.b32.xlu0 %v2201, 64
        %v2227 = vpop.permute.xlu0 %2226
        %2230 = vrot.lane.b32.xlu0 %v2211, 80
        %v2231 = vpop.permute.xlu0 %2230
        %2234 = vrot.lane.b32.xlu0 %v2208, 96
        %v2235 = vpop.permute.xlu0 %2234
        %2238 = vrot.lane.b32.xlu0 %v2212, 112
        %v2239 = vpop.permute.xlu0 %2238
        %v2241 = vsel %vm281, %v2185, %v2215
        %v2242 = vsel %vm283, %v2241, %v2219
        %v2243 = vsel %vm285, %v2242, %v2223
        %v2244 = vsel %vm287, %v2243, %v2227
        %v2245 = vsel %vm289, %v2244, %v2231
        %v2246 = vsel %vm291, %v2245, %v2235
        %v2247 = vsel %vm293, %v2246, %v2239
        %2248 = vrot.lane.b32.xlu0 %v1907, 125
        %v2249 = vpop.permute.xlu0 %2248
        %2250 = vrot.lane.b32.xlu0 %v1908, 125
        %v2251 = vpop.permute.xlu0 %2250
        %2252 = vrot.lane.b32.xlu0 %v1909, 125
        %v2253 = vpop.permute.xlu0 %2252
        %2254 = vrot.lane.b32.xlu0 %v1910, 125
        %v2255 = vpop.permute.xlu0 %2254
        %v2260 = vcombine.low %v2249, %v2253
        %v2261 = vcombine.high %v2249, %v2253
        %v2263 = vunpack.c.l.s4 1983009808
        %v2264 = vunpack.c.0.s8 %v2263
        %v2265 = vlaneseq
        %v2266 = vshrl.u32 %v2265, 7
        %v2267 = vsub.s32 %v2264, %v2266
        %v2268 = vrot.slane %v2260, %v2267
        %v2270 = vunpack.c.l.s4 1983009808
        %v2271 = vunpack.c.0.s8 %v2270
        %v2272 = vlaneseq
        %v2273 = vshrl.u32 %v2272, 7
        %v2274 = vsub.s32 %v2271, %v2273
        %v2275 = vrot.slane %v2261, %v2274
        %v2276 = vcombine.low %v2251, %v2255
        %v2277 = vcombine.high %v2251, %v2255
        %v2279 = vunpack.c.l.s4 1983009808
        %v2280 = vunpack.c.0.s8 %v2279
        %v2281 = vlaneseq
        %v2282 = vshrl.u32 %v2281, 7
        %v2283 = vsub.s32 %v2280, %v2282
        %v2284 = vrot.slane %v2276, %v2283
        %v2286 = vunpack.c.l.s4 1983009808
        %v2287 = vunpack.c.0.s8 %v2286
        %v2288 = vlaneseq
        %v2289 = vshrl.u32 %v2288, 7
        %v2290 = vsub.s32 %v2287, %v2289
        %v2291 = vrot.slane %v2277, %v2290
        %v2292 = vcombine.low %v2268, %v2284
        %v2293 = vcombine.high %v2268, %v2284
        %v2295 = vunpack.c.l.s4 1934713408
        %v2296 = vunpack.c.0.s8 %v2295
        %v2297 = vlaneseq
        %v2298 = vshrl.u32 %v2297, 7
        %v2299 = vsub.s32 %v2296, %v2298
        %v2300 = vrot.slane %v2292, %v2299
        %v2302 = vunpack.c.l.s4 1934713408
        %v2303 = vunpack.c.0.s8 %v2302
        %v2304 = vlaneseq
        %v2305 = vshrl.u32 %v2304, 7
        %v2306 = vsub.s32 %v2303, %v2305
        %v2307 = vrot.slane %v2293, %v2306
        %v2308 = vcombine.low %v2275, %v2291
        %v2309 = vcombine.high %v2275, %v2291
        %v2311 = vunpack.c.l.s4 1934713408
        %v2312 = vunpack.c.0.s8 %v2311
        %v2313 = vlaneseq
        %v2314 = vshrl.u32 %v2313, 7
        %v2315 = vsub.s32 %v2312, %v2314
        %v2316 = vrot.slane %v2308, %v2315
        %v2318 = vunpack.c.l.s4 1934713408
        %v2319 = vunpack.c.0.s8 %v2318
        %v2320 = vlaneseq
        %v2321 = vshrl.u32 %v2320, 7
        %v2322 = vsub.s32 %v2319, %v2321
        %v2323 = vrot.slane %v2309, %v2322
        %v2324 = vcombine.high %v2300, 0.0
        %v2325 = vcombine.high %v2307, 0.0
        %v2326 = vcombine.high %v2316, 0.0
        %v2327 = vcombine.high %v2323, 0.0
        %2329 = vrot.lane.b32.xlu0 %v2324, 16
        %v2330 = vpop.permute.xlu0 %2329
        %2333 = vrot.lane.b32.xlu0 %v2307, 32
        %v2334 = vpop.permute.xlu0 %2333
        %2337 = vrot.lane.b32.xlu0 %v2325, 48
        %v2338 = vpop.permute.xlu0 %2337
        %2341 = vrot.lane.b32.xlu0 %v2316, 64
        %v2342 = vpop.permute.xlu0 %2341
        %2345 = vrot.lane.b32.xlu0 %v2326, 80
        %v2346 = vpop.permute.xlu0 %2345
        %2349 = vrot.lane.b32.xlu0 %v2323, 96
        %v2350 = vpop.permute.xlu0 %2349
        %2353 = vrot.lane.b32.xlu0 %v2327, 112
        %v2354 = vpop.permute.xlu0 %2353
        %v2356 = vsel %vm281, %v2300, %v2330
        %v2357 = vsel %vm283, %v2356, %v2334
        %v2358 = vsel %vm285, %v2357, %v2338
        %v2359 = vsel %vm287, %v2358, %v2342
        %v2360 = vsel %vm289, %v2359, %v2346
        %v2361 = vsel %vm291, %v2360, %v2350
        %v2362 = vsel %vm293, %v2361, %v2354
        %2363 = vrot.lane.b32.xlu0 %v1907, 124
        %v2364 = vpop.permute.xlu0 %2363
        %2365 = vrot.lane.b32.xlu0 %v1908, 124
        %v2366 = vpop.permute.xlu0 %2365
        %2367 = vrot.lane.b32.xlu0 %v1909, 124
        %v2368 = vpop.permute.xlu0 %2367
        %2369 = vrot.lane.b32.xlu0 %v1910, 124
        %v2370 = vpop.permute.xlu0 %2369
        %v2375 = vcombine.low %v2364, %v2368
        %v2376 = vcombine.high %v2364, %v2368
        %v2378 = vunpack.c.l.s4 1983009808
        %v2379 = vunpack.c.0.s8 %v2378
        %v2380 = vlaneseq
        %v2381 = vshrl.u32 %v2380, 7
        %v2382 = vsub.s32 %v2379, %v2381
        %v2383 = vrot.slane %v2375, %v2382
        %v2385 = vunpack.c.l.s4 1983009808
        %v2386 = vunpack.c.0.s8 %v2385
        %v2387 = vlaneseq
        %v2388 = vshrl.u32 %v2387, 7
        %v2389 = vsub.s32 %v2386, %v2388
        %v2390 = vrot.slane %v2376, %v2389
        %v2391 = vcombine.low %v2366, %v2370
        %v2392 = vcombine.high %v2366, %v2370
        %v2394 = vunpack.c.l.s4 1983009808
        %v2395 = vunpack.c.0.s8 %v2394
        %v2396 = vlaneseq
        %v2397 = vshrl.u32 %v2396, 7
        %v2398 = vsub.s32 %v2395, %v2397
        %v2399 = vrot.slane %v2391, %v2398
        %v2401 = vunpack.c.l.s4 1983009808
        %v2402 = vunpack.c.0.s8 %v2401
        %v2403 = vlaneseq
        %v2404 = vshrl.u32 %v2403, 7
        %v2405 = vsub.s32 %v2402, %v2404
        %v2406 = vrot.slane %v2392, %v2405
        %v2407 = vcombine.low %v2383, %v2399
        %v2408 = vcombine.high %v2383, %v2399
        %v2410 = vunpack.c.l.s4 1934713408
        %v2411 = vunpack.c.0.s8 %v2410
        %v2412 = vlaneseq
        %v2413 = vshrl.u32 %v2412, 7
        %v2414 = vsub.s32 %v2411, %v2413
        %v2415 = vrot.slane %v2407, %v2414
        %v2417 = vunpack.c.l.s4 1934713408
        %v2418 = vunpack.c.0.s8 %v2417
        %v2419 = vlaneseq
        %v2420 = vshrl.u32 %v2419, 7
        %v2421 = vsub.s32 %v2418, %v2420
        %v2422 = vrot.slane %v2408, %v2421
        %v2423 = vcombine.low %v2390, %v2406
        %v2424 = vcombine.high %v2390, %v2406
        %v2426 = vunpack.c.l.s4 1934713408
        %v2427 = vunpack.c.0.s8 %v2426
        %v2428 = vlaneseq
        %v2429 = vshrl.u32 %v2428, 7
        %v2430 = vsub.s32 %v2427, %v2429
        %v2431 = vrot.slane %v2423, %v2430
        %v2433 = vunpack.c.l.s4 1934713408
        %v2434 = vunpack.c.0.s8 %v2433
        %v2435 = vlaneseq
        %v2436 = vshrl.u32 %v2435, 7
        %v2437 = vsub.s32 %v2434, %v2436
        %v2438 = vrot.slane %v2424, %v2437
        %v2439 = vcombine.high %v2415, 0.0
        %v2440 = vcombine.high %v2422, 0.0
        %v2441 = vcombine.high %v2431, 0.0
        %v2442 = vcombine.high %v2438, 0.0
        %2444 = vrot.lane.b32.xlu0 %v2439, 16
        %v2445 = vpop.permute.xlu0 %2444
        %2448 = vrot.lane.b32.xlu0 %v2422, 32
        %v2449 = vpop.permute.xlu0 %2448
        %2452 = vrot.lane.b32.xlu0 %v2440, 48
        %v2453 = vpop.permute.xlu0 %2452
        %2456 = vrot.lane.b32.xlu0 %v2431, 64
        %v2457 = vpop.permute.xlu0 %2456
        %2460 = vrot.lane.b32.xlu0 %v2441, 80
        %v2461 = vpop.permute.xlu0 %2460
        %2464 = vrot.lane.b32.xlu0 %v2438, 96
        %v2465 = vpop.permute.xlu0 %2464
        %2468 = vrot.lane.b32.xlu0 %v2442, 112
        %v2469 = vpop.permute.xlu0 %2468
        %v2471 = vsel %vm281, %v2415, %v2445
        %v2472 = vsel %vm283, %v2471, %v2449
        %v2473 = vsel %vm285, %v2472, %v2453
        %v2474 = vsel %vm287, %v2473, %v2457
        %v2475 = vsel %vm289, %v2474, %v2461
        %v2476 = vsel %vm291, %v2475, %v2465
        %v2477 = vsel %vm293, %v2476, %v2469
        %s2478 = sadd.s32 %s179, 4
        %s2479 = scalar_lea.vmem %s178, %s2478
        %v2480 = vld [vmem:[%s2479] sm:$0xff]
        %v2481 = vld [vmem:[%s2479 + $0x18] sm:$0xff]
        %v2482 = vld [vmem:[%s2479 + $0x30] sm:$0xff]
        %v2483 = vld [vmem:[%s2479 + $0x48] sm:$0xff]
        %v2484 = vcombine.low %v2480, %v2482
        %v2485 = vcombine.high %v2480, %v2482
        %v2487 = vunpack.c.l.s4 1983009808
        %v2488 = vunpack.c.0.s8 %v2487
        %v2489 = vlaneseq
        %v2490 = vshrl.u32 %v2489, 7
        %v2491 = vsub.s32 %v2488, %v2490
        %v2492 = vrot.slane %v2484, %v2491
        %v2494 = vunpack.c.l.s4 1983009808
        %v2495 = vunpack.c.0.s8 %v2494
        %v2496 = vlaneseq
        %v2497 = vshrl.u32 %v2496, 7
        %v2498 = vsub.s32 %v2495, %v2497
        %v2499 = vrot.slane %v2485, %v2498
        %v2500 = vcombine.low %v2481, %v2483
        %v2501 = vcombine.high %v2481, %v2483
        %v2503 = vunpack.c.l.s4 1983009808
        %v2504 = vunpack.c.0.s8 %v2503
        %v2505 = vlaneseq
        %v2506 = vshrl.u32 %v2505, 7
        %v2507 = vsub.s32 %v2504, %v2506
        %v2508 = vrot.slane %v2500, %v2507
        %v2510 = vunpack.c.l.s4 1983009808
        %v2511 = vunpack.c.0.s8 %v2510
        %v2512 = vlaneseq
        %v2513 = vshrl.u32 %v2512, 7
        %v2514 = vsub.s32 %v2511, %v2513
        %v2515 = vrot.slane %v2501, %v2514
        %v2516 = vcombine.low %v2492, %v2508
        %v2517 = vcombine.high %v2492, %v2508
        %v2519 = vunpack.c.l.s4 1934713408
        %v2520 = vunpack.c.0.s8 %v2519
        %v2521 = vlaneseq
        %v2522 = vshrl.u32 %v2521, 7
        %v2523 = vsub.s32 %v2520, %v2522
        %v2524 = vrot.slane %v2516, %v2523
        %v2526 = vunpack.c.l.s4 1934713408
        %v2527 = vunpack.c.0.s8 %v2526
        %v2528 = vlaneseq
        %v2529 = vshrl.u32 %v2528, 7
        %v2530 = vsub.s32 %v2527, %v2529
        %v2531 = vrot.slane %v2517, %v2530
        %v2532 = vcombine.low %v2499, %v2515
        %v2533 = vcombine.high %v2499, %v2515
        %v2535 = vunpack.c.l.s4 1934713408
        %v2536 = vunpack.c.0.s8 %v2535
        %v2537 = vlaneseq
        %v2538 = vshrl.u32 %v2537, 7
        %v2539 = vsub.s32 %v2536, %v2538
        %v2540 = vrot.slane %v2532, %v2539
        %v2542 = vunpack.c.l.s4 1934713408
        %v2543 = vunpack.c.0.s8 %v2542
        %v2544 = vlaneseq
        %v2545 = vshrl.u32 %v2544, 7
        %v2546 = vsub.s32 %v2543, %v2545
        %v2547 = vrot.slane %v2533, %v2546
        %v2548 = vcombine.high %v2524, 0.0
        %v2549 = vcombine.high %v2531, 0.0
        %v2550 = vcombine.high %v2540, 0.0
        %v2551 = vcombine.high %v2547, 0.0
        %2553 = vrot.lane.b32.xlu0 %v2548, 16
        %v2554 = vpop.permute.xlu0 %2553
        %2557 = vrot.lane.b32.xlu0 %v2531, 32
        %v2558 = vpop.permute.xlu0 %2557
        %2561 = vrot.lane.b32.xlu0 %v2549, 48
        %v2562 = vpop.permute.xlu0 %2561
        %2565 = vrot.lane.b32.xlu0 %v2540, 64
        %v2566 = vpop.permute.xlu0 %2565
        %2569 = vrot.lane.b32.xlu0 %v2550, 80
        %v2570 = vpop.permute.xlu0 %2569
        %2573 = vrot.lane.b32.xlu0 %v2547, 96
        %v2574 = vpop.permute.xlu0 %2573
        %2577 = vrot.lane.b32.xlu0 %v2551, 112
        %v2578 = vpop.permute.xlu0 %2577
        %v2580 = vsel %vm281, %v2524, %v2554
        %v2581 = vsel %vm283, %v2580, %v2558
        %v2582 = vsel %vm285, %v2581, %v2562
        %v2583 = vsel %vm287, %v2582, %v2566
        %v2584 = vsel %vm289, %v2583, %v2570
        %v2585 = vsel %vm291, %v2584, %v2574
        %v2586 = vsel %vm293, %v2585, %v2578
        %2591 = vrot.lane.b32.xlu0 %v2480, 127
        %v2592 = vpop.permute.xlu0 %2591
        %2593 = vrot.lane.b32.xlu0 %v2481, 127
        %v2594 = vpop.permute.xlu0 %2593
        %2595 = vrot.lane.b32.xlu0 %v2482, 127
        %v2596 = vpop.permute.xlu0 %2595
        %2597 = vrot.lane.b32.xlu0 %v2483, 127
        %v2598 = vpop.permute.xlu0 %2597
        %v2603 = vcombine.low %v2592, %v2596
        %v2604 = vcombine.high %v2592, %v2596
        %v2606 = vunpack.c.l.s4 1983009808
        %v2607 = vunpack.c.0.s8 %v2606
        %v2608 = vlaneseq
        %v2609 = vshrl.u32 %v2608, 7
        %v2610 = vsub.s32 %v2607, %v2609
        %v2611 = vrot.slane %v2603, %v2610
        %v2613 = vunpack.c.l.s4 1983009808
        %v2614 = vunpack.c.0.s8 %v2613
        %v2615 = vlaneseq
        %v2616 = vshrl.u32 %v2615, 7
        %v2617 = vsub.s32 %v2614, %v2616
        %v2618 = vrot.slane %v2604, %v2617
        %v2619 = vcombine.low %v2594, %v2598
        %v2620 = vcombine.high %v2594, %v2598
        %v2622 = vunpack.c.l.s4 1983009808
        %v2623 = vunpack.c.0.s8 %v2622
        %v2624 = vlaneseq
        %v2625 = vshrl.u32 %v2624, 7
        %v2626 = vsub.s32 %v2623, %v2625
        %v2627 = vrot.slane %v2619, %v2626
        %v2629 = vunpack.c.l.s4 1983009808
        %v2630 = vunpack.c.0.s8 %v2629
        %v2631 = vlaneseq
        %v2632 = vshrl.u32 %v2631, 7
        %v2633 = vsub.s32 %v2630, %v2632
        %v2634 = vrot.slane %v2620, %v2633
        %v2635 = vcombine.low %v2611, %v2627
        %v2636 = vcombine.high %v2611, %v2627
        %v2638 = vunpack.c.l.s4 1934713408
        %v2639 = vunpack.c.0.s8 %v2638
        %v2640 = vlaneseq
        %v2641 = vshrl.u32 %v2640, 7
        %v2642 = vsub.s32 %v2639, %v2641
        %v2643 = vrot.slane %v2635, %v2642
        %v2645 = vunpack.c.l.s4 1934713408
        %v2646 = vunpack.c.0.s8 %v2645
        %v2647 = vlaneseq
        %v2648 = vshrl.u32 %v2647, 7
        %v2649 = vsub.s32 %v2646, %v2648
        %v2650 = vrot.slane %v2636, %v2649
        %v2651 = vcombine.low %v2618, %v2634
        %v2652 = vcombine.high %v2618, %v2634
        %v2654 = vunpack.c.l.s4 1934713408
        %v2655 = vunpack.c.0.s8 %v2654
        %v2656 = vlaneseq
        %v2657 = vshrl.u32 %v2656, 7
        %v2658 = vsub.s32 %v2655, %v2657
        %v2659 = vrot.slane %v2651, %v2658
        %v2661 = vunpack.c.l.s4 1934713408
        %v2662 = vunpack.c.0.s8 %v2661
        %v2663 = vlaneseq
        %v2664 = vshrl.u32 %v2663, 7
        %v2665 = vsub.s32 %v2662, %v2664
        %v2666 = vrot.slane %v2652, %v2665
        %v2667 = vcombine.high %v2643, 0.0
        %v2668 = vcombine.high %v2650, 0.0
        %v2669 = vcombine.high %v2659, 0.0
        %v2670 = vcombine.high %v2666, 0.0
        %2672 = vrot.lane.b32.xlu0 %v2667, 16
        %v2673 = vpop.permute.xlu0 %2672
        %2676 = vrot.lane.b32.xlu0 %v2650, 32
        %v2677 = vpop.permute.xlu0 %2676
        %2680 = vrot.lane.b32.xlu0 %v2668, 48
        %v2681 = vpop.permute.xlu0 %2680
        %2684 = vrot.lane.b32.xlu0 %v2659, 64
        %v2685 = vpop.permute.xlu0 %2684
        %2688 = vrot.lane.b32.xlu0 %v2669, 80
        %v2689 = vpop.permute.xlu0 %2688
        %2692 = vrot.lane.b32.xlu0 %v2666, 96
        %v2693 = vpop.permute.xlu0 %2692
        %2696 = vrot.lane.b32.xlu0 %v2670, 112
        %v2697 = vpop.permute.xlu0 %2696
        %v2699 = vsel %vm281, %v2643, %v2673
        %v2700 = vsel %vm283, %v2699, %v2677
        %v2701 = vsel %vm285, %v2700, %v2681
        %v2702 = vsel %vm287, %v2701, %v2685
        %v2703 = vsel %vm289, %v2702, %v2689
        %v2704 = vsel %vm291, %v2703, %v2693
        %v2705 = vsel %vm293, %v2704, %v2697
        %2706 = vrot.lane.b32.xlu0 %v2480, 126
        %v2707 = vpop.permute.xlu0 %2706
        %2708 = vrot.lane.b32.xlu0 %v2481, 126
        %v2709 = vpop.permute.xlu0 %2708
        %2710 = vrot.lane.b32.xlu0 %v2482, 126
        %v2711 = vpop.permute.xlu0 %2710
        %2712 = vrot.lane.b32.xlu0 %v2483, 126
        %v2713 = vpop.permute.xlu0 %2712
        %v2718 = vcombine.low %v2707, %v2711
        %v2719 = vcombine.high %v2707, %v2711
        %v2721 = vunpack.c.l.s4 1983009808
        %v2722 = vunpack.c.0.s8 %v2721
        %v2723 = vlaneseq
        %v2724 = vshrl.u32 %v2723, 7
        %v2725 = vsub.s32 %v2722, %v2724
        %v2726 = vrot.slane %v2718, %v2725
        %v2728 = vunpack.c.l.s4 1983009808
        %v2729 = vunpack.c.0.s8 %v2728
        %v2730 = vlaneseq
        %v2731 = vshrl.u32 %v2730, 7
        %v2732 = vsub.s32 %v2729, %v2731
        %v2733 = vrot.slane %v2719, %v2732
        %v2734 = vcombine.low %v2709, %v2713
        %v2735 = vcombine.high %v2709, %v2713
        %v2737 = vunpack.c.l.s4 1983009808
        %v2738 = vunpack.c.0.s8 %v2737
        %v2739 = vlaneseq
        %v2740 = vshrl.u32 %v2739, 7
        %v2741 = vsub.s32 %v2738, %v2740
        %v2742 = vrot.slane %v2734, %v2741
        %v2744 = vunpack.c.l.s4 1983009808
        %v2745 = vunpack.c.0.s8 %v2744
        %v2746 = vlaneseq
        %v2747 = vshrl.u32 %v2746, 7
        %v2748 = vsub.s32 %v2745, %v2747
        %v2749 = vrot.slane %v2735, %v2748
        %v2750 = vcombine.low %v2726, %v2742
        %v2751 = vcombine.high %v2726, %v2742
        %v2753 = vunpack.c.l.s4 1934713408
        %v2754 = vunpack.c.0.s8 %v2753
        %v2755 = vlaneseq
        %v2756 = vshrl.u32 %v2755, 7
        %v2757 = vsub.s32 %v2754, %v2756
        %v2758 = vrot.slane %v2750, %v2757
        %v2760 = vunpack.c.l.s4 1934713408
        %v2761 = vunpack.c.0.s8 %v2760
        %v2762 = vlaneseq
        %v2763 = vshrl.u32 %v2762, 7
        %v2764 = vsub.s32 %v2761, %v2763
        %v2765 = vrot.slane %v2751, %v2764
        %v2766 = vcombine.low %v2733, %v2749
        %v2767 = vcombine.high %v2733, %v2749
        %v2769 = vunpack.c.l.s4 1934713408
        %v2770 = vunpack.c.0.s8 %v2769
        %v2771 = vlaneseq
        %v2772 = vshrl.u32 %v2771, 7
        %v2773 = vsub.s32 %v2770, %v2772
        %v2774 = vrot.slane %v2766, %v2773
        %v2776 = vunpack.c.l.s4 1934713408
        %v2777 = vunpack.c.0.s8 %v2776
        %v2778 = vlaneseq
        %v2779 = vshrl.u32 %v2778, 7
        %v2780 = vsub.s32 %v2777, %v2779
        %v2781 = vrot.slane %v2767, %v2780
        %v2782 = vcombine.high %v2758, 0.0
        %v2783 = vcombine.high %v2765, 0.0
        %v2784 = vcombine.high %v2774, 0.0
        %v2785 = vcombine.high %v2781, 0.0
        %2787 = vrot.lane.b32.xlu0 %v2782, 16
        %v2788 = vpop.permute.xlu0 %2787
        %2791 = vrot.lane.b32.xlu0 %v2765, 32
        %v2792 = vpop.permute.xlu0 %2791
        %2795 = vrot.lane.b32.xlu0 %v2783, 48
        %v2796 = vpop.permute.xlu0 %2795
        %2799 = vrot.lane.b32.xlu0 %v2774, 64
        %v2800 = vpop.permute.xlu0 %2799
        %2803 = vrot.lane.b32.xlu0 %v2784, 80
        %v2804 = vpop.permute.xlu0 %2803
        %2807 = vrot.lane.b32.xlu0 %v2781, 96
        %v2808 = vpop.permute.xlu0 %2807
        %2811 = vrot.lane.b32.xlu0 %v2785, 112
        %v2812 = vpop.permute.xlu0 %2811
        %v2814 = vsel %vm281, %v2758, %v2788
        %v2815 = vsel %vm283, %v2814, %v2792
        %v2816 = vsel %vm285, %v2815, %v2796
        %v2817 = vsel %vm287, %v2816, %v2800
        %v2818 = vsel %vm289, %v2817, %v2804
        %v2819 = vsel %vm291, %v2818, %v2808
        %v2820 = vsel %vm293, %v2819, %v2812
        %2821 = vrot.lane.b32.xlu0 %v2480, 125
        %v2822 = vpop.permute.xlu0 %2821
        %2823 = vrot.lane.b32.xlu0 %v2481, 125
        %v2824 = vpop.permute.xlu0 %2823
        %2825 = vrot.lane.b32.xlu0 %v2482, 125
        %v2826 = vpop.permute.xlu0 %2825
        %2827 = vrot.lane.b32.xlu0 %v2483, 125
        %v2828 = vpop.permute.xlu0 %2827
        %v2833 = vcombine.low %v2822, %v2826
        %v2834 = vcombine.high %v2822, %v2826
        %v2836 = vunpack.c.l.s4 1983009808
        %v2837 = vunpack.c.0.s8 %v2836
        %v2838 = vlaneseq
        %v2839 = vshrl.u32 %v2838, 7
        %v2840 = vsub.s32 %v2837, %v2839
        %v2841 = vrot.slane %v2833, %v2840
        %v2843 = vunpack.c.l.s4 1983009808
        %v2844 = vunpack.c.0.s8 %v2843
        %v2845 = vlaneseq
        %v2846 = vshrl.u32 %v2845, 7
        %v2847 = vsub.s32 %v2844, %v2846
        %v2848 = vrot.slane %v2834, %v2847
        %v2849 = vcombine.low %v2824, %v2828
        %v2850 = vcombine.high %v2824, %v2828
        %v2852 = vunpack.c.l.s4 1983009808
        %v2853 = vunpack.c.0.s8 %v2852
        %v2854 = vlaneseq
        %v2855 = vshrl.u32 %v2854, 7
        %v2856 = vsub.s32 %v2853, %v2855
        %v2857 = vrot.slane %v2849, %v2856
        %v2859 = vunpack.c.l.s4 1983009808
        %v2860 = vunpack.c.0.s8 %v2859
        %v2861 = vlaneseq
        %v2862 = vshrl.u32 %v2861, 7
        %v2863 = vsub.s32 %v2860, %v2862
        %v2864 = vrot.slane %v2850, %v2863
        %v2865 = vcombine.low %v2841, %v2857
        %v2866 = vcombine.high %v2841, %v2857
        %v2868 = vunpack.c.l.s4 1934713408
        %v2869 = vunpack.c.0.s8 %v2868
        %v2870 = vlaneseq
        %v2871 = vshrl.u32 %v2870, 7
        %v2872 = vsub.s32 %v2869, %v2871
        %v2873 = vrot.slane %v2865, %v2872
        %v2875 = vunpack.c.l.s4 1934713408
        %v2876 = vunpack.c.0.s8 %v2875
        %v2877 = vlaneseq
        %v2878 = vshrl.u32 %v2877, 7
        %v2879 = vsub.s32 %v2876, %v2878
        %v2880 = vrot.slane %v2866, %v2879
        %v2881 = vcombine.low %v2848, %v2864
        %v2882 = vcombine.high %v2848, %v2864
        %v2884 = vunpack.c.l.s4 1934713408
        %v2885 = vunpack.c.0.s8 %v2884
        %v2886 = vlaneseq
        %v2887 = vshrl.u32 %v2886, 7
        %v2888 = vsub.s32 %v2885, %v2887
        %v2889 = vrot.slane %v2881, %v2888
        %v2891 = vunpack.c.l.s4 1934713408
        %v2892 = vunpack.c.0.s8 %v2891
        %v2893 = vlaneseq
        %v2894 = vshrl.u32 %v2893, 7
        %v2895 = vsub.s32 %v2892, %v2894
        %v2896 = vrot.slane %v2882, %v2895
        %v2897 = vcombine.high %v2873, 0.0
        %v2898 = vcombine.high %v2880, 0.0
        %v2899 = vcombine.high %v2889, 0.0
        %v2900 = vcombine.high %v2896, 0.0
        %2902 = vrot.lane.b32.xlu0 %v2897, 16
        %v2903 = vpop.permute.xlu0 %2902
        %2906 = vrot.lane.b32.xlu0 %v2880, 32
        %v2907 = vpop.permute.xlu0 %2906
        %2910 = vrot.lane.b32.xlu0 %v2898, 48
        %v2911 = vpop.permute.xlu0 %2910
        %2914 = vrot.lane.b32.xlu0 %v2889, 64
        %v2915 = vpop.permute.xlu0 %2914
        %2918 = vrot.lane.b32.xlu0 %v2899, 80
        %v2919 = vpop.permute.xlu0 %2918
        %2922 = vrot.lane.b32.xlu0 %v2896, 96
        %v2923 = vpop.permute.xlu0 %2922
        %2926 = vrot.lane.b32.xlu0 %v2900, 112
        %v2927 = vpop.permute.xlu0 %2926
        %v2929 = vsel %vm281, %v2873, %v2903
        %v2930 = vsel %vm283, %v2929, %v2907
        %v2931 = vsel %vm285, %v2930, %v2911
        %v2932 = vsel %vm287, %v2931, %v2915
        %v2933 = vsel %vm289, %v2932, %v2919
        %v2934 = vsel %vm291, %v2933, %v2923
        %v2935 = vsel %vm293, %v2934, %v2927
        %2936 = vrot.lane.b32.xlu0 %v2480, 124
        %v2937 = vpop.permute.xlu0 %2936
        %2938 = vrot.lane.b32.xlu0 %v2481, 124
        %v2939 = vpop.permute.xlu0 %2938
        %2940 = vrot.lane.b32.xlu0 %v2482, 124
        %v2941 = vpop.permute.xlu0 %2940
        %2942 = vrot.lane.b32.xlu0 %v2483, 124
        %v2943 = vpop.permute.xlu0 %2942
        %v2948 = vcombine.low %v2937, %v2941
        %v2949 = vcombine.high %v2937, %v2941
        %v2951 = vunpack.c.l.s4 1983009808
        %v2952 = vunpack.c.0.s8 %v2951
        %v2953 = vlaneseq
        %v2954 = vshrl.u32 %v2953, 7
        %v2955 = vsub.s32 %v2952, %v2954
        %v2956 = vrot.slane %v2948, %v2955
        %v2958 = vunpack.c.l.s4 1983009808
        %v2959 = vunpack.c.0.s8 %v2958
        %v2960 = vlaneseq
        %v2961 = vshrl.u32 %v2960, 7
        %v2962 = vsub.s32 %v2959, %v2961
        %v2963 = vrot.slane %v2949, %v2962
        %v2964 = vcombine.low %v2939, %v2943
        %v2965 = vcombine.high %v2939, %v2943
        %v2967 = vunpack.c.l.s4 1983009808
        %v2968 = vunpack.c.0.s8 %v2967
        %v2969 = vlaneseq
        %v2970 = vshrl.u32 %v2969, 7
        %v2971 = vsub.s32 %v2968, %v2970
        %v2972 = vrot.slane %v2964, %v2971
        %v2974 = vunpack.c.l.s4 1983009808
        %v2975 = vunpack.c.0.s8 %v2974
        %v2976 = vlaneseq
        %v2977 = vshrl.u32 %v2976, 7
        %v2978 = vsub.s32 %v2975, %v2977
        %v2979 = vrot.slane %v2965, %v2978
        %v2980 = vcombine.low %v2956, %v2972
        %v2981 = vcombine.high %v2956, %v2972
        %v2983 = vunpack.c.l.s4 1934713408
        %v2984 = vunpack.c.0.s8 %v2983
        %v2985 = vlaneseq
        %v2986 = vshrl.u32 %v2985, 7
        %v2987 = vsub.s32 %v2984, %v2986
        %v2988 = vrot.slane %v2980, %v2987
        %v2990 = vunpack.c.l.s4 1934713408
        %v2991 = vunpack.c.0.s8 %v2990
        %v2992 = vlaneseq
        %v2993 = vshrl.u32 %v2992, 7
        %v2994 = vsub.s32 %v2991, %v2993
        %v2995 = vrot.slane %v2981, %v2994
        %v2996 = vcombine.low %v2963, %v2979
        %v2997 = vcombine.high %v2963, %v2979
        %v2999 = vunpack.c.l.s4 1934713408
        %v3000 = vunpack.c.0.s8 %v2999
        %v3001 = vlaneseq
        %v3002 = vshrl.u32 %v3001, 7
        %v3003 = vsub.s32 %v3000, %v3002
        %v3004 = vrot.slane %v2996, %v3003
        %v3006 = vunpack.c.l.s4 1934713408
        %v3007 = vunpack.c.0.s8 %v3006
        %v3008 = vlaneseq
        %v3009 = vshrl.u32 %v3008, 7
        %v3010 = vsub.s32 %v3007, %v3009
        %v3011 = vrot.slane %v2997, %v3010
        %v3012 = vcombine.high %v2988, 0.0
        %v3013 = vcombine.high %v2995, 0.0
        %v3014 = vcombine.high %v3004, 0.0
        %v3015 = vcombine.high %v3011, 0.0
        %3017 = vrot.lane.b32.xlu0 %v3012, 16
        %v3018 = vpop.permute.xlu0 %3017
        %3021 = vrot.lane.b32.xlu0 %v2995, 32
        %v3022 = vpop.permute.xlu0 %3021
        %3025 = vrot.lane.b32.xlu0 %v3013, 48
        %v3026 = vpop.permute.xlu0 %3025
        %3029 = vrot.lane.b32.xlu0 %v3004, 64
        %v3030 = vpop.permute.xlu0 %3029
        %3033 = vrot.lane.b32.xlu0 %v3014, 80
        %v3034 = vpop.permute.xlu0 %3033
        %3037 = vrot.lane.b32.xlu0 %v3011, 96
        %v3038 = vpop.permute.xlu0 %3037
        %3041 = vrot.lane.b32.xlu0 %v3015, 112
        %v3042 = vpop.permute.xlu0 %3041
        %v3044 = vsel %vm281, %v2988, %v3018
        %v3045 = vsel %vm283, %v3044, %v3022
        %v3046 = vsel %vm285, %v3045, %v3026
        %v3047 = vsel %vm287, %v3046, %v3030
        %v3048 = vsel %vm289, %v3047, %v3034
        %v3049 = vsel %vm291, %v3048, %v3038
        %v3050 = vsel %vm293, %v3049, %v3042
        %v3052 = vrot.slane %v413, 4
        %v3055 = vrot.slane %v643, 4
        %v3058 = vrot.slane %v867, 4
        %v3061 = vrot.slane %v1101, 4
        %v3064 = vrot.slane %v1331, 4
        %v3067 = vrot.slane %v1559, 4
        %v3070 = vrot.slane %v1789, 4
        %v3073 = vrot.slane %v2013, 4
        %vm3075 = vcmask 1043456
        %v3076 = vsel %vm3075, %v294, %v3052
        %v3077 = vsel %vm3075, %v528, %v3055
        %v3078 = vsel %vm3075, %v758, %v3058
        %v3079 = vsel %vm3075, %v986, %v3061
        %v3080 = vsel %vm3075, %v1216, %v3064
        %v3081 = vsel %vm3075, %v1440, %v3067
        %v3082 = vsel %vm3075, %v1674, %v3070
        %v3083 = vsel %vm3075, %v1904, %v3073
        %v3085 = vrot.slane %v2247, 4
        %v3088 = vrot.slane %v2477, 4
        %v3091 = vrot.slane %v2705, 4
        %v3094 = vrot.slane %v2935, 4
        %v3096 = vsel %vm3075, %v2132, %v3085
        %v3097 = vsel %vm3075, %v2362, %v3088
        %v3098 = vsel %vm3075, %v2586, %v3091
        %v3099 = vsel %vm3075, %v2820, %v3094
        %v3100 = vld [vmem:[%s1] sm:$0xff]
        %v3101 = vld [vmem:[%s1 + $0x8] sm:$0xf]
        %v3102 = vld [vmem:[%s2] sm:$0xff]
        %v3103 = vld [vmem:[%s2 + $0x8] sm:$0xf]
        %3105 = vset.pattern.permute.xlu0 0
        %3106 = vperm.xlu0 %3105, %v3102
        %v3107 = vpop.permute.xlu0 %3106
        %3110 = vset.pattern.permute.xlu0 0
        %3111 = vperm.xlu0 %3110, %v3103
        %v3112 = vpop.permute.xlu0 %3111
        %vm3114 = vcmask 818176
        %v3116 = vsel %vm3114, %v3100, 0
        %v3119 = vsel %vm3114, %v3101, 0
        %v3122 = vsel %vm3075, %v3050, 0
        %3124 = vmatprep.subr.mxu0 0.0
        %3125 = vmatpush1.msra.mxu0 %v3076
        %3126 = vmatprep.subr.mxu0 0.0
        %3127 = vmatpush1.msra.mxu0 %v3077
        %3128 = vmatprep.subr.mxu0 0.0
        %3129 = vmatpush1.msra.mxu0 %v3078
        %3130 = vmatprep.subr.mxu0 0.0
        %3131 = vmatpush1.msra.mxu0 %v3079
        %3132 = vmatprep.subr.mxu0 0.0
        %3133 = vmatpush1.msra.mxu0 %v3080
        %3134 = vmatprep.subr.mxu0 0.0
        %3135 = vmatpush1.msra.mxu0 %v3081
        %3136 = vmatprep.subr.mxu0 0.0
        %3137 = vmatpush1.msra.mxu0 %v3082
        %3138 = vmatprep.subr.mxu0 0.0
        %3139 = vmatpush1.msra.mxu0 %v3083
        %3140 = vmatprep.subr.mxu0 0.0
        %3141 = vmatpush1.msra.mxu0 %v3096
        %3142 = vmatprep.subr.mxu0 0.0
        %3143 = vmatpush1.msra.mxu0 %v3097
        %3144 = vmatprep.subr.mxu0 0.0
        %3145 = vmatpush1.msra.mxu0 %v3098
        %3146 = vmatprep.subr.mxu0 0.0
        %3147 = vmatpush1.msra.mxu0 %v3099
        %3148 = vmatprep.subr.mxu0 0.0
        %3149 = vmatpush1.msra.mxu0 %v3122
        %3150 = vmatprep.subr.mxu0 0.0
        %3151 = vmatpush1.msra.mxu0 0.0
        %3152 = vmatprep.subr.mxu0 0.0
        %3153 = vmatpush1.msra.mxu0 0.0
        %3154 = vmatprep.subr.mxu0 0.0
        %3155 = vmatpush1.msra.mxu0 0.0
        %3156 = vmatprep.subr.mxu0 0.0
        %3157 = vmatpush1.msra.mxu0 0.0
        %3158 = vmatprep.subr.mxu0 0.0
        %3159 = vmatpush1.msra.mxu0 0.0
        %3160 = vmatprep.subr.mxu0 0.0
        %3161 = vmatpush1.msra.mxu0 0.0
        %3162 = vmatprep.subr.mxu0 0.0
        %3163 = vmatpush1.msra.mxu0 0.0
        %3164 = vmatprep.subr.mxu0 0.0
        %3165 = vmatpush1.msra.mxu0 0.0
        %3166 = vmatprep.subr.mxu0 0.0
        %3167 = vmatpush1.msra.mxu0 0.0
        %3168 = vmatprep.subr.mxu0 0.0
        %3169 = vmatpush1.msra.mxu0 0.0
        %3170 = vmatprep.subr.mxu0 0.0
        %3171 = vmatpush1.msra.mxu0 0.0
        %3172 = vmatprep.subr.mxu0 0.0
        %3173 = vmatpush1.msra.mxu0 0.0
        %3174 = vmatprep.subr.mxu0 0.0
        %3175 = vmatpush1.msra.mxu0 0.0
        %3176 = vmatprep.subr.mxu0 0.0
        %3177 = vmatpush1.msra.mxu0 0.0
        %3178 = vmatprep.subr.mxu0 0.0
        %3179 = vmatpush1.msra.mxu0 0.0
        %3180 = vmatprep.subr.mxu0 0.0
        %3181 = vmatpush1.msra.mxu0 0.0
        %3182 = vmatprep.subr.mxu0 0.0
        %3183 = vmatpush1.msra.mxu0 0.0
        %3184 = vmatprep.subr.mxu0 0.0
        %3185 = vmatpush1.msra.mxu0 0.0
        %3186 = vmatprep.subr.mxu0 0.0
        %3187 = vmatpush1.msra.mxu0 0.0
        %3188 = vmatprep.mubr.f32.mxu0 0.0
        %3189 = vmatmul.mubr.f32.gmra.mrb[0].mxu0 %v3116
        %v3190 = vpop.f32.mrb[0].mxu0
        %v3191 = vadd.f32 %v3107, %v3190
        %v3192 = vpop.f32.mrb[0].mxu0
        %3193 = vmatprep.mubr.f32.mxu0 0.0
        %3194 = vmatmul.mubr.f32.gmra.mrb[0].mxu0 %v3119
        %v3195 = vpop.f32.mrb[0].mxu0
        %v3196 = vadd.f32 %v3112, %v3195
        %v3197 = vpop.f32.mrb[0].mxu0
        %3198 = vdwg.mxu0
        %v3199 = vmax.f32 %v3191, 0.0
        %v3200 = vmax.f32 %v3196, 0.0
        %3201 = vst [vmem:[%s173] sm:$0xff] %v3199
        %3202 = vst [vmem:[%s173 + $0x8] sm:$0xf] %v3200
        %s3203 = sand.u32 %s104, 1
        %s3204 = sand.u32 %s104, 1
        %s3205 = smul.addr %s3204, 16
        %s3206 = scalar_lea.vmem [#allocation2], %s3205
        // Predicated region
        $region33: #{tpu_custom_call.1} parent=31 // pred_check
          %p3207 = pneg %p114
        $region34: #{tpu_custom_call.1} parent=31 // pred_check_branch
          %3209 = sbr.rel (%p3207) target = $region36
        $region35: #{tpu_custom_call.1} parent=31 // pred_region
          %s3210 = smul.addr %s18, 4
          %s3211 = sadd.s32 %s19, %s3210
          %s3212 = smul.addr %s3211, 8
          %s3213 = scalar_lea.vmem %s3, %s3212
          // Predicated region
          $region37: #{tpu_custom_call.1} parent=35 // pred_check
            _
          $region38: #{tpu_custom_call.1} parent=35 // pred_check_branch
            %3215 = sbr.rel (0) target = $region40
          $region39: #{tpu_custom_call.1} parent=35 // pred_region
            // Predicated region
            $region41: #{tpu_custom_call.1} parent=39 // pred_check
              _
            $region42: #{tpu_custom_call.1} parent=39 // pred_check_branch
              %3217 = sbr.rel (0) target = $region44
            $region43: #{tpu_custom_call.1} parent=39 // pred_region
              // Predicated region
              $region56: #{tpu_custom_call.1} parent=43 // pred_check
                _
              $region57: #{tpu_custom_call.1} parent=43 // pred_check_branch
                %3234 = sbr.rel (0) target = $region59
              $region58: #{tpu_custom_call.1} parent=43 // pred_region
                loop: start=0, step=1, limit=1
                $region60: #{tpu_custom_call.1} parent=58 // loop_pre_header
                  _
                $region61: #{tpu_custom_call.1} parent=58 // loop_header
                  %s3236 = sphi 0, %s3240
                  %p3237 = scmp.ge.s32.totalorder %s3236, 1
                  %s3241 = sphi %s3206, %s3206
                  %s3242 = sphi %s3213, %s3213
                $region62: #{tpu_custom_call.1} parent=58 // loop_header_branch
                  %3239 = sbr.rel (%p3237) target = $region66
                $region63: #{tpu_custom_call.1} parent=58 // loop_body
                  %v3243 = vld [vmem:[%s3241] sm:$0xff]
                  %3244 = vst [vmem:[%s3242] sm:$0xff] %v3243
                  %v3245 = vld [vmem:[%s3241 + $0x8] sm:$0xff]
                  %3246 = vst [vmem:[%s3242 + $0x10] sm:$0xff] %v3245
                $region64: #{tpu_custom_call.1} parent=58 // loop_footer
                  %s3240 = sadd.s32 1, %s3236
                $region65: #{tpu_custom_call.1} parent=58 // loop_footer_branch
                  %3235 = sbr.rel target = $region61
                $region66: #{tpu_custom_call.1} parent=58 // loop_exit
                  _
              $region59: #{tpu_custom_call.1} parent=43 // pred_fallthru
                _
              // Predicated region
              $region67: #{tpu_custom_call.1} parent=43 // pred_check
                _
              $region68: #{tpu_custom_call.1} parent=43 // pred_check_branch
                %3248 = sbr.rel target = $region70
              $region69: #{tpu_custom_call.1} parent=43 // pred_region
                _
              $region70: #{tpu_custom_call.1} parent=43 // pred_fallthru
                _
            $region44: #{tpu_custom_call.1} parent=39 // pred_fallthru
              _
            // Predicated region
            $region45: #{tpu_custom_call.1} parent=39 // pred_check
              _
            $region46: #{tpu_custom_call.1} parent=39 // pred_check_branch
              %3219 = sbr.rel target = $region48
            $region47: #{tpu_custom_call.1} parent=39 // pred_region
              loop: start=0, step=1, limit=1
              $region49: #{tpu_custom_call.1} parent=47 // loop_pre_header
                _
              $region50: #{tpu_custom_call.1} parent=47 // loop_header
                %s3222 = sphi 0, %s3226
                %p3223 = scmp.ge.s32.totalorder %s3222, 1
                %s3227 = sphi %s3206, %s3206
                %s3228 = sphi %s3213, %s3213
              $region51: #{tpu_custom_call.1} parent=47 // loop_header_branch
                %3225 = sbr.rel (%p3223) target = $region55
              $region52: #{tpu_custom_call.1} parent=47 // loop_body
                %v3229 = vld [vmem:[%s3227] sm:$0xff]
                %3230 = vst [vmem:[%s3228] sm:$0xff] %v3229
                %v3231 = vld [vmem:[%s3227 + $0x8] sm:$0xff]
                %3232 = vst [vmem:[%s3228 + $0x10] sm:$0xff] %v3231
              $region53: #{tpu_custom_call.1} parent=47 // loop_footer
                %s3226 = sadd.s32 1, %s3222
              $region54: #{tpu_custom_call.1} parent=47 // loop_footer_branch
                %3221 = sbr.rel target = $region50
              $region55: #{tpu_custom_call.1} parent=47 // loop_exit
                _
            $region48: #{tpu_custom_call.1} parent=39 // pred_fallthru
              _
          $region40: #{tpu_custom_call.1} parent=35 // pred_fallthru
            _
          %3249 = vnop
        $region36: #{tpu_custom_call.1} parent=31 // pred_fallthru
          _
      $region32: #{tpu_custom_call.1} parent=5 // pred_fallthru
        _
      %p3250 = scmp.le.s32.totalorder 2, %s9
      // Predicated region
      $region71: #{tpu_custom_call.1} parent=5 // pred_check
        %p3251 = pneg %p3250
      $region72: #{tpu_custom_call.1} parent=5 // pred_check_branch
        %3253 = sbr.rel (%p3251) target = $region74
      $region73: #{tpu_custom_call.1} parent=5 // pred_region
        %s3254 = ssub.s32 %s9, 2
        // Predicated region
        $region75: #{tpu_custom_call.1} parent=73 // pred_check
          %p3255 = pneg %p120
        $region76: #{tpu_custom_call.1} parent=73 // pred_check_branch
          %3257 = sbr.rel (%p3255) target = $region78
        $region77: #{tpu_custom_call.1} parent=73 // pred_region
          %s3258 = sand.u32 %s105, 1
          %s3259 = sand.u32 %s105, 1
          %s3260 = smul.addr %s3259, 16
          %s3261 = scalar_lea.vmem [#allocation2], %s3260
        $region78: #{tpu_custom_call.1} parent=73 // pred_fallthru
          _
      $region74: #{tpu_custom_call.1} parent=5 // pred_fallthru
        _
    $region6: #{tpu_custom_call.1} parent=1 // loop_footer
      %s13 = sadd.s32 1, %s9
    $region7: #{tpu_custom_call.1} parent=1 // loop_footer_branch
      %8 = sbr.rel target = $region3
    $region8: #{tpu_custom_call.1} parent=1 // loop_exit
      _

</llo_original>
